<compile_context>
chip_gen: v7x
topology: tpu7x:2x2x1
jax: 0.10.0
libtpu: 0.0.40
codegen_flags: <defaults>
</compile_context>

<pallas_src>
import functools

import jax
import jax.numpy as jnp
from jax import lax
from jax.experimental import pallas as pl
from jax.experimental.pallas import tpu as pltpu


def _extral_stage_kernel(
    x_ref,        # (1, Npix, Cin)   polyphase-packed, zero-padded pixels
    mask_ref,     # (Npix, 1)        1.0 for real pixels, 0.0 for padding
    w1_ref,       # (Cin, Cmid)      1x1 conv #1, BN1 scale folded in
    b1_ref,       # (1, Cmid)        BN1 shift
    wd_ref,       # (9, Cmid)        3x3 depthwise taps (row = kh*3+kw), BN2 scale folded
    b2_ref,       # (1, Cmid)        BN2 shift
    w2_ref,       # (Cmid, Oup_pad)  1x1 conv #2, BN3 scale folded, lane-padded
    b3_ref,       # (1, Oup_pad)     BN3 shift, lane-padded
    o_ref,        # (1, L_acc, Oup_pad) output (valid pixels at flat idx ho*Wq+wo)
    y1_scr,       # VMEM scratch (Npix, Cmid)
    *, s, Hq, Wq, Ho, Wo, L_acc,
):
    f32 = jnp.float32

    # ---- stage 1: 1x1 conv == one matmul over every (padded) pixel, + BN + ReLU.
    # The mask re-zeroes the padding pixels (otherwise they'd be ReLU(b1) != 0),
    # reproducing the zero padding the depthwise conv applies to its input.
    x = x_ref[0]                                                  # (Npix, Cin)
    y1 = jnp.dot(x, w1_ref[...], preferred_element_type=f32)      # (Npix, Cmid)
    y1 = jnp.maximum(y1 + b1_ref[...], 0.0) * mask_ref[...]
    y1_scr[...] = y1                                              # single store

    # ---- stage 2: 3x3 depthwise conv (stride) over ALL output pixels at once.
    # Polyphase packing makes every tap a contiguous slice: element u of a tap
    # corresponds to output pixel (ho, wo) with u = ho*Wq + wo (gap entries with
    # wo >= Wo carry garbage and are discarded by the wrapper).
    acc = None
    for kh in range(3):                                           # 9 static taps
        for kw in range(3):
            ph, a = kh % s, kh // s
            pw, b = kw % s, kw // s
            start = ((ph * s + pw) * Hq + a) * Wq + b
            tap = y1_scr[start:start + L_acc, :]                  # (L_acc, Cmid)
            k = kh * 3 + kw
            term = tap * wd_ref[k:k + 1, :]
            acc = term if acc is None else acc + term
    dw = jnp.maximum(acc + b2_ref[...], 0.0)                      # BN2 shift + ReLU

    # ---- stage 3: 1x1 conv as ONE matmul + BN + ReLU, lane-dense single store.
    out = jnp.dot(dw, w2_ref[...], preferred_element_type=f32)    # (L_acc, Oup_pad)
    o_ref[0] = jnp.maximum(out + b3_ref[...], 0.0)


def extral_stage_pallas(x_nchw, params, *, stride, pad):
    """Runs the fused ExtralStage kernel.  Input/output are NCHW like PyTorch."""
    assert stride in (1, 2)
    N, Cin, H, W = x_nchw.shape
    Cmid = params["w1"].shape[1]
    Oup = params["w2"].shape[1]
    s = stride
    Hp, Wp = H + 2 * pad, W + 2 * pad
    Ho = (Hp - 3) // s + 1
    Wo = (Wp - 3) // s + 1
    Hq = -(-Hp // s)                      # ceil(Hp/s): per-phase grid height
    Wq = -(-Wp // s)
    Npix = s * s * Hq * Wq
    L_acc = (Ho - 1) * Wq + Wo            # flat span covering all output pixels
    Oup_pad = ((Oup + 127) // 128) * 128  # lane-dense output store

    # --- host-side data prep: NHWC, zero-pad, polyphase repack ---------------
    x_nhwc = jnp.transpose(x_nchw, (0, 2, 3, 1))
    eh, ew = Hq * s - H - pad, Wq * s - W - pad
    x_padded = jnp.pad(x_nhwc, ((0, 0), (pad, eh), (pad, ew), (0, 0)))
    x_ph = x_padded.reshape(N, Hq, s, Wq, s, Cin).transpose(0, 2, 4, 1, 3, 5)
    x_flat = x_ph.reshape(N, Npix, Cin)

    mask2d = jnp.pad(jnp.ones((H, W), jnp.float32), ((pad, eh), (pad, ew)))
    mask = mask2d.reshape(Hq, s, Wq, s).transpose(1, 3, 0, 2).reshape(Npix, 1)

    # --- fold BN scales into the conv weights (one-time weight prep) ---------
    w1f = params["w1"] * params["s1"]                                   # (Cin, Cmid)
    wdf = (params["wd"] * params["s2"].reshape(1, 1, Cmid)).reshape(9, Cmid)
    w2f = jnp.pad(params["w2"] * params["s3"], ((0, 0), (0, Oup_pad - Oup)))
    b3f = jnp.pad(params["b3"], ((0, 0), (0, Oup_pad - Oup)))

    kernel = functools.partial(_extral_stage_kernel, s=s, Hq=Hq, Wq=Wq,
                               Ho=Ho, Wo=Wo, L_acc=L_acc)

    out_flat = pl.pallas_call(
        kernel,
        out_shape=jax.ShapeDtypeStruct((N, L_acc, Oup_pad), jnp.float32),
        grid_spec=pltpu.PrefetchScalarGridSpec(
            num_scalar_prefetch=0,
            grid=(N,),
            in_specs=[
                pl.BlockSpec((1, Npix, Cin), lambda n: (n, 0, 0)),
                pl.BlockSpec((Npix, 1), lambda n: (0, 0)),
                pl.BlockSpec((Cin, Cmid), lambda n: (0, 0)),
                pl.BlockSpec((1, Cmid), lambda n: (0, 0)),
                pl.BlockSpec((9, Cmid), lambda n: (0, 0)),
                pl.BlockSpec((1, Cmid), lambda n: (0, 0)),
                pl.BlockSpec((Cmid, Oup_pad), lambda n: (0, 0)),
                pl.BlockSpec((1, Oup_pad), lambda n: (0, 0)),
            ],
            out_specs=pl.BlockSpec((1, L_acc, Oup_pad), lambda n: (n, 0, 0)),
            scratch_shapes=[pltpu.VMEM((Npix, Cmid), jnp.float32)],
        ),
        compiler_params=pltpu.CompilerParams(
            dimension_semantics=("parallel",)),
    )(x_flat, mask, w1f, params["b1"], wdf, params["b2"], w2f, b3f)

    # --- un-flatten: valid output pixels live at flat index ho*Wq + wo -------
    out_full = jnp.pad(out_flat, ((0, 0), (0, Ho * Wq - L_acc), (0, 0)))
    out_nhwc = out_full.reshape(N, Ho, Wq, Oup_pad)[:, :, :Wo, :Oup]
    return jnp.transpose(out_nhwc, (0, 3, 1, 2))   # back to NCHW


def init_params(key, Cin, Oup):
    """Deterministic synthetic weights.  Conv weights stored matmul-ready."""
    Cmid = Cin // 2
    ks = jax.random.split(key, 15)
    eps = 1e-5

    def bn(kg, kb, km, kv, C):
        gamma = 1.0 + 0.1 * jax.random.normal(kg, (C,), jnp.float32)
        beta = 0.1 * jax.random.normal(kb, (C,), jnp.float32)
        mean = 0.1 * jax.random.normal(km, (C,), jnp.float32)
        var = 0.5 + jax.random.uniform(kv, (C,), jnp.float32)
        scale = gamma / jnp.sqrt(var + eps)
        shift = beta - mean * scale
        return scale.reshape(1, C), shift.reshape(1, C)

    w1 = 0.3 * jax.random.normal(ks[0], (Cin, Cmid), jnp.float32)   # 1x1 conv (in, out)
    wd = 0.3 * jax.random.normal(ks[1], (3, 3, Cmid), jnp.float32)  # depthwise (kh, kw, c)
    w2 = 0.3 * jax.random.normal(ks[2], (Cmid, Oup), jnp.float32)   # 1x1 conv (in, out)
    s1, b1 = bn(ks[3], ks[4], ks[5], ks[6], Cmid)
    s2, b2 = bn(ks[7], ks[8], ks[9], ks[10], Cmid)
    s3, b3 = bn(ks[11], ks[12], ks[13], ks[14], Oup)
    return dict(w1=w1, wd=wd, w2=w2, s1=s1, b1=b1, s2=s2, b2=b2, s3=s3, b3=b3)


def reference_forward(x_nchw, params, *, stride, pad):
    """Pure-XLA reference matching torch Conv2d/BN(eval)/ReLU semantics (NCHW)."""
    Cmid = params["w1"].shape[1]
    dn = ("NCHW", "OIHW", "NCHW")

    def bn_relu(y, s, b):
        return jnp.maximum(y * s.reshape(1, -1, 1, 1) + b.reshape(1, -1, 1, 1), 0.0)

    w1 = jnp.transpose(params["w1"], (1, 0))[:, :, None, None]      # (Cmid, Cin, 1, 1)
    y = lax.conv_general_dilated(x_nchw, w1, (1, 1), "VALID", dimension_numbers=dn)
    y = bn_relu(y, params["s1"], params["b1"])

    wd = jnp.transpose(params["wd"], (2, 0, 1))[:, None]            # (Cmid, 1, 3, 3)
    y = lax.conv_general_dilated(y, wd, (stride, stride), [(pad, pad), (pad, pad)],
                                 dimension_numbers=dn, feature_group_count=Cmid)
    y = bn_relu(y, params["s2"], params["b2"])

    w2 = jnp.transpose(params["w2"], (1, 0))[:, :, None, None]      # (Oup, Cmid, 1, 1)
    y = lax.conv_general_dilated(y, w2, (1, 1), "VALID", dimension_numbers=dn)
    y = bn_relu(y, params["s3"], params["b3"])
    return y


if __name__ == "__main__":
    # ExtralStage(inp=8, oup=16, stride=2, padding=1) on a 2x8x16x16 input.
    N, Cin, H, W = 2, 8, 16, 16
    Oup, stride, pad = 16, 2, 1

    key = jax.random.PRNGKey(0)
    kx, kp = jax.random.split(key)
    x = jax.random.normal(kx, (N, Cin, H, W), jnp.float32)
    params = init_params(kp, Cin, Oup)

    out = extral_stage_pallas(x, params, stride=stride, pad=pad)
    out = jax.block_until_ready(out)

    ref = reference_forward(x, params, stride=stride, pad=pad)
    assert out.shape == ref.shape, (out.shape, ref.shape)
    if not jnp.allclose(out, ref, atol=3e-2, rtol=3e-2):
        raise AssertionError(
            f"mismatch vs reference, max abs err = {jnp.max(jnp.abs(out - ref))}")
    print("KERNEL_OK")
</pallas_src>

<mosaic_0001>
module attributes {stable_mosaic.version = 11 : i64} {
  func.func @_extral_stage_kernel(%arg0: i32, %arg1: memref<1x324x8xf32, #tpu.memory_space<vmem>>, %arg2: memref<324x1xf32, #tpu.memory_space<vmem>>, %arg3: memref<8x4xf32, #tpu.memory_space<vmem>>, %arg4: memref<1x4xf32, #tpu.memory_space<vmem>>, %arg5: memref<9x4xf32, #tpu.memory_space<vmem>>, %arg6: memref<1x4xf32, #tpu.memory_space<vmem>>, %arg7: memref<4x128xf32, #tpu.memory_space<vmem>>, %arg8: memref<1x128xf32, #tpu.memory_space<vmem>>, %arg9: memref<1x71x128xf32, #tpu.memory_space<vmem>>, %arg10: memref<324x4xf32, #tpu.memory_space<vmem>>) attributes {dimension_semantics = [#tpu.dimension_semantics<parallel>], iteration_bounds = array<i64: 2>, scalar_prefetch = 0 : i64, scratch_operands = 1 : i64, tpu.core_type = #tpu.core_type<tc>, window_params = [{transform_indices = @transform_0, window_bounds = array<i64: 1, 324, 8>}, {pipeline_mode = #tpu.pipeline_mode<synchronous>, transform_indices = @transform_1, window_bounds = array<i64: 324, 1>}, {pipeline_mode = #tpu.pipeline_mode<synchronous>, transform_indices = @transform_2, window_bounds = array<i64: 8, 4>}, {pipeline_mode = #tpu.pipeline_mode<synchronous>, transform_indices = @transform_3, window_bounds = array<i64: 1, 4>}, {pipeline_mode = #tpu.pipeline_mode<synchronous>, transform_indices = @transform_4, window_bounds = array<i64: 9, 4>}, {pipeline_mode = #tpu.pipeline_mode<synchronous>, transform_indices = @transform_5, window_bounds = array<i64: 1, 4>}, {pipeline_mode = #tpu.pipeline_mode<synchronous>, transform_indices = @transform_6, window_bounds = array<i64: 4, 128>}, {pipeline_mode = #tpu.pipeline_mode<synchronous>, transform_indices = @transform_7, window_bounds = array<i64: 1, 128>}, {transform_indices = @transform_8, window_bounds = array<i64: 1, 71, 128>}]} {
    %c0 = arith.constant 0 : index
    %c0_0 = arith.constant 0 : index
    %c0_1 = arith.constant 0 : index
    %0 = vector.load %arg1[%c0, %c0_0, %c0_1] : memref<1x324x8xf32, #tpu.memory_space<vmem>>, vector<1x324x8xf32>
    %1 = vector.shape_cast %0 : vector<1x324x8xf32> to vector<324x8xf32>
    %c0_2 = arith.constant 0 : index
    %c0_3 = arith.constant 0 : index
    %2 = vector.load %arg3[%c0_2, %c0_3] : memref<8x4xf32, #tpu.memory_space<vmem>>, vector<8x4xf32>
    %cst = arith.constant dense<0.000000e+00> : vector<324x4xf32>
    %3 = tpu.matmul %1, %2, %cst {dimension_numbers = #tpu.dot_dimension_numbers<[1], [0], [0], [1], [0, 0, 1, 1], [], []>} : vector<324x8xf32>, vector<8x4xf32>, vector<324x4xf32> -> vector<324x4xf32>
    %c0_4 = arith.constant 0 : index
    %c0_5 = arith.constant 0 : index
    %4 = vector.load %arg4[%c0_4, %c0_5] : memref<1x4xf32, #tpu.memory_space<vmem>>, vector<1x4xf32>
    %5 = vector.broadcast %4 : vector<1x4xf32> to vector<324x4xf32>
    %6 = arith.addf %3, %5 : vector<324x4xf32>
    %cst_6 = arith.constant 0.000000e+00 : f32
    %7 = vector.broadcast %cst_6 : f32 to vector<324x4xf32>
    %8 = arith.maximumf %6, %7 : vector<324x4xf32>
    %c0_7 = arith.constant 0 : index
    %c0_8 = arith.constant 0 : index
    %9 = vector.load %arg2[%c0_7, %c0_8] : memref<324x1xf32, #tpu.memory_space<vmem>>, vector<324x1xf32>
    %10 = vector.broadcast %9 : vector<324x1xf32> to vector<324x4xf32>
    %11 = arith.mulf %8, %10 : vector<324x4xf32>
    %c0_9 = arith.constant 0 : index
    %c0_10 = arith.constant 0 : index
    %12 = vector.load %arg10[%c0_9, %c0_10] : memref<324x4xf32, #tpu.memory_space<vmem>>, vector<324x4xf32>
    tpu.vector_store %arg10[%c0_9, %c0_10], %11 {strides = array<i32>} : memref<324x4xf32, #tpu.memory_space<vmem>>, vector<324x4xf32>,
    %c0_11 = arith.constant 0 : index
    %c0_12 = arith.constant 0 : index
    %13 = vector.load %arg10[%c0_11, %c0_12] : memref<324x4xf32, #tpu.memory_space<vmem>>, vector<71x4xf32>
    %c0_13 = arith.constant 0 : index
    %c0_14 = arith.constant 0 : index
    %14 = vector.load %arg5[%c0_13, %c0_14] : memref<9x4xf32, #tpu.memory_space<vmem>>, vector<1x4xf32>
    %15 = vector.broadcast %14 : vector<1x4xf32> to vector<71x4xf32>
    %16 = arith.mulf %13, %15 : vector<71x4xf32>
    %c81 = arith.constant 81 : index
    %c0_15 = arith.constant 0 : index
    %17 = vector.load %arg10[%c81, %c0_15] : memref<324x4xf32, #tpu.memory_space<vmem>>, vector<71x4xf32>
    %c1 = arith.constant 1 : index
    %c0_16 = arith.constant 0 : index
    %18 = vector.load %arg5[%c1, %c0_16] : memref<9x4xf32, #tpu.memory_space<vmem>>, vector<1x4xf32>
    %19 = vector.broadcast %18 : vector<1x4xf32> to vector<71x4xf32>
    %20 = arith.mulf %17, %19 : vector<71x4xf32>
    %21 = arith.addf %16, %20 : vector<71x4xf32>
    %c1_17 = arith.constant 1 : index
    %c0_18 = arith.constant 0 : index
    %22 = vector.load %arg10[%c1_17, %c0_18] : memref<324x4xf32, #tpu.memory_space<vmem>>, vector<71x4xf32>
    %c2 = arith.constant 2 : index
    %c0_19 = arith.constant 0 : index
    %23 = vector.load %arg5[%c2, %c0_19] : memref<9x4xf32, #tpu.memory_space<vmem>>, vector<1x4xf32>
    %24 = vector.broadcast %23 : vector<1x4xf32> to vector<71x4xf32>
    %25 = arith.mulf %22, %24 : vector<71x4xf32>
    %26 = arith.addf %21, %25 : vector<71x4xf32>
    %c162 = arith.constant 162 : index
    %c0_20 = arith.constant 0 : index
    %27 = vector.load %arg10[%c162, %c0_20] : memref<324x4xf32, #tpu.memory_space<vmem>>, vector<71x4xf32>
    %c3 = arith.constant 3 : index
    %c0_21 = arith.constant 0 : index
    %28 = vector.load %arg5[%c3, %c0_21] : memref<9x4xf32, #tpu.memory_space<vmem>>, vector<1x4xf32>
    %29 = vector.broadcast %28 : vector<1x4xf32> to vector<71x4xf32>
    %30 = arith.mulf %27, %29 : vector<71x4xf32>
    %31 = arith.addf %26, %30 : vector<71x4xf32>
    %c243 = arith.constant 243 : index
    %c0_22 = arith.constant 0 : index
    %32 = vector.load %arg10[%c243, %c0_22] : memref<324x4xf32, #tpu.memory_space<vmem>>, vector<71x4xf32>
    %c4 = arith.constant 4 : index
    %c0_23 = arith.constant 0 : index
    %33 = vector.load %arg5[%c4, %c0_23] : memref<9x4xf32, #tpu.memory_space<vmem>>, vector<1x4xf32>
    %34 = vector.broadcast %33 : vector<1x4xf32> to vector<71x4xf32>
    %35 = arith.mulf %32, %34 : vector<71x4xf32>
    %36 = arith.addf %31, %35 : vector<71x4xf32>
    %c163 = arith.constant 163 : index
    %c0_24 = arith.constant 0 : index
    %37 = vector.load %arg10[%c163, %c0_24] : memref<324x4xf32, #tpu.memory_space<vmem>>, vector<71x4xf32>
    %c5 = arith.constant 5 : index
    %c0_25 = arith.constant 0 : index
    %38 = vector.load %arg5[%c5, %c0_25] : memref<9x4xf32, #tpu.memory_space<vmem>>, vector<1x4xf32>
    %39 = vector.broadcast %38 : vector<1x4xf32> to vector<71x4xf32>
    %40 = arith.mulf %37, %39 : vector<71x4xf32>
    %41 = arith.addf %36, %40 : vector<71x4xf32>
    %c9 = arith.constant 9 : index
    %c0_26 = arith.constant 0 : index
    %42 = vector.load %arg10[%c9, %c0_26] : memref<324x4xf32, #tpu.memory_space<vmem>>, vector<71x4xf32>
    %c6 = arith.constant 6 : index
    %c0_27 = arith.constant 0 : index
    %43 = vector.load %arg5[%c6, %c0_27] : memref<9x4xf32, #tpu.memory_space<vmem>>, vector<1x4xf32>
    %44 = vector.broadcast %43 : vector<1x4xf32> to vector<71x4xf32>
    %45 = arith.mulf %42, %44 : vector<71x4xf32>
    %46 = arith.addf %41, %45 : vector<71x4xf32>
    %c90 = arith.constant 90 : index
    %c0_28 = arith.constant 0 : index
    %47 = vector.load %arg10[%c90, %c0_28] : memref<324x4xf32, #tpu.memory_space<vmem>>, vector<71x4xf32>
    %c7 = arith.constant 7 : index
    %c0_29 = arith.constant 0 : index
    %48 = vector.load %arg5[%c7, %c0_29] : memref<9x4xf32, #tpu.memory_space<vmem>>, vector<1x4xf32>
    %49 = vector.broadcast %48 : vector<1x4xf32> to vector<71x4xf32>
    %50 = arith.mulf %47, %49 : vector<71x4xf32>
    %51 = arith.addf %46, %50 : vector<71x4xf32>
    %c10 = arith.constant 10 : index
    %c0_30 = arith.constant 0 : index
    %52 = vector.load %arg10[%c10, %c0_30] : memref<324x4xf32, #tpu.memory_space<vmem>>, vector<71x4xf32>
    %c8 = arith.constant 8 : index
    %c0_31 = arith.constant 0 : index
    %53 = vector.load %arg5[%c8, %c0_31] : memref<9x4xf32, #tpu.memory_space<vmem>>, vector<1x4xf32>
    %54 = vector.broadcast %53 : vector<1x4xf32> to vector<71x4xf32>
    %55 = arith.mulf %52, %54 : vector<71x4xf32>
    %56 = arith.addf %51, %55 : vector<71x4xf32>
    %c0_32 = arith.constant 0 : index
    %c0_33 = arith.constant 0 : index
    %57 = vector.load %arg6[%c0_32, %c0_33] : memref<1x4xf32, #tpu.memory_space<vmem>>, vector<1x4xf32>
    %58 = vector.broadcast %57 : vector<1x4xf32> to vector<71x4xf32>
    %59 = arith.addf %56, %58 : vector<71x4xf32>
    %cst_34 = arith.constant 0.000000e+00 : f32
    %60 = vector.broadcast %cst_34 : f32 to vector<71x4xf32>
    %61 = arith.maximumf %59, %60 : vector<71x4xf32>
    %c0_35 = arith.constant 0 : index
    %c0_36 = arith.constant 0 : index
    %62 = vector.load %arg7[%c0_35, %c0_36] : memref<4x128xf32, #tpu.memory_space<vmem>>, vector<4x128xf32>
    %cst_37 = arith.constant dense<0.000000e+00> : vector<71x128xf32>
    %63 = tpu.matmul %61, %62, %cst_37 {dimension_numbers = #tpu.dot_dimension_numbers<[1], [0], [0], [1], [0, 0, 1, 1], [], []>} : vector<71x4xf32>, vector<4x128xf32>, vector<71x128xf32> -> vector<71x128xf32>
    %c0_38 = arith.constant 0 : index
    %c0_39 = arith.constant 0 : index
    %64 = vector.load %arg8[%c0_38, %c0_39] : memref<1x128xf32, #tpu.memory_space<vmem>>, vector<1x128xf32>
    %65 = vector.broadcast %64 : vector<1x128xf32> to vector<71x128xf32>
    %66 = arith.addf %63, %65 : vector<71x128xf32>
    %cst_40 = arith.constant 0.000000e+00 : f32
    %67 = vector.broadcast %cst_40 : f32 to vector<71x128xf32>
    %68 = arith.maximumf %66, %67 : vector<71x128xf32>
    %c0_41 = arith.constant 0 : index
    %c0_42 = arith.constant 0 : index
    %c0_43 = arith.constant 0 : index
    %69 = vector.load %arg9[%c0_41, %c0_42, %c0_43] : memref<1x71x128xf32, #tpu.memory_space<vmem>>, vector<1x71x128xf32>
    %70 = vector.shape_cast %69 : vector<1x71x128xf32> to vector<71x128xf32>
    %71 = vector.shape_cast %68 : vector<71x128xf32> to vector<1x71x128xf32>
    tpu.vector_store %arg9[%c0_41, %c0_42, %c0_43], %71 {strides = array<i32>} : memref<1x71x128xf32, #tpu.memory_space<vmem>>, vector<1x71x128xf32>,
    return
  }
  func.func @transform_0(%arg0: i32) -> (i32, i32, i32) {
    %c0_i32 = arith.constant 0 : i32
    %c0_i32_0 = arith.constant 0 : i32
    %c0_i32_1 = arith.constant 0 : i32
    return %arg0, %c0_i32, %c0_i32_0 : i32, i32, i32
  }
  func.func @transform_1(%arg0: i32) -> (i32, i32) {
    %c0_i32 = arith.constant 0 : i32
    %c0_i32_0 = arith.constant 0 : i32
    %c0_i32_1 = arith.constant 0 : i32
    return %c0_i32, %c0_i32_0 : i32, i32
  }
  func.func @transform_2(%arg0: i32) -> (i32, i32) {
    %c0_i32 = arith.constant 0 : i32
    %c0_i32_0 = arith.constant 0 : i32
    %c0_i32_1 = arith.constant 0 : i32
    return %c0_i32, %c0_i32_0 : i32, i32
  }
  func.func @transform_3(%arg0: i32) -> (i32, i32) {
    %c0_i32 = arith.constant 0 : i32
    %c0_i32_0 = arith.constant 0 : i32
    %c0_i32_1 = arith.constant 0 : i32
    return %c0_i32, %c0_i32_0 : i32, i32
  }
  func.func @transform_4(%arg0: i32) -> (i32, i32) {
    %c0_i32 = arith.constant 0 : i32
    %c0_i32_0 = arith.constant 0 : i32
    %c0_i32_1 = arith.constant 0 : i32
    return %c0_i32, %c0_i32_0 : i32, i32
  }
  func.func @transform_5(%arg0: i32) -> (i32, i32) {
    %c0_i32 = arith.constant 0 : i32
    %c0_i32_0 = arith.constant 0 : i32
    %c0_i32_1 = arith.constant 0 : i32
    return %c0_i32, %c0_i32_0 : i32, i32
  }
  func.func @transform_6(%arg0: i32) -> (i32, i32) {
    %c0_i32 = arith.constant 0 : i32
    %c0_i32_0 = arith.constant 0 : i32
    %c0_i32_1 = arith.constant 0 : i32
    return %c0_i32, %c0_i32_0 : i32, i32
  }
  func.func @transform_7(%arg0: i32) -> (i32, i32) {
    %c0_i32 = arith.constant 0 : i32
    %c0_i32_0 = arith.constant 0 : i32
    %c0_i32_1 = arith.constant 0 : i32
    return %c0_i32, %c0_i32_0 : i32, i32
  }
  func.func @transform_8(%arg0: i32) -> (i32, i32, i32) {
    %c0_i32 = arith.constant 0 : i32
    %c0_i32_0 = arith.constant 0 : i32
    %c0_i32_1 = arith.constant 0 : i32
    return %arg0, %c0_i32, %c0_i32_0 : i32, i32, i32
  }
}

</mosaic_0001>

<llo_original>
// kernel: tpu_custom_call.1
$region0: #{tpu_custom_call.1}
  #allocation0 [shape = 'u32[]', space=smem, size = 0x4, offset = 0x4, fixed_abs, tag = 'smem constant byte address 0x4 - core index']
  #allocation1 [shape = 'u32[144,128]{1,0:T(1,128)}', space=vmem, size = 0x12000, scoped, tag = 'internal scratch']
  #allocation2 [shape = 'f32[324,4]{1,0:T(8,128)}', space=vmem, size = 0x29000, scoped, tag = 'scratch operand']
  %s0 = inlined_call_operand.vmem [shape: f32[2,324,8], index: 0, kind: input, shape index: {}]
  %s1 = inlined_call_operand.vmem [shape: f32[324,1], index: 1, kind: input, shape index: {}]
  %s2 = inlined_call_operand.vmem [shape: f32[8,4], index: 2, kind: input, shape index: {}]
  %s3 = inlined_call_operand.vmem [shape: f32[1,4], index: 3, kind: input, shape index: {}]
  %s4 = inlined_call_operand.vmem [shape: f32[9,4], index: 4, kind: input, shape index: {}]
  %s5 = inlined_call_operand.vmem [shape: f32[1,4], index: 5, kind: input, shape index: {}]
  %s6 = inlined_call_operand.vmem [shape: f32[4,128], index: 6, kind: input, shape index: {}]
  %s7 = inlined_call_operand.vmem [shape: f32[1,128], index: 7, kind: input, shape index: {}]
  %s8 = inlined_call_operand.vmem [shape: f32[2,71,128], index: 8, kind: output, shape index: {}]
  %s9 = sld [smem:[#allocation0]]
  $region65: #{tpu_custom_call.1} parent=0
    _
  %s11 = ssub.s32 1, %s9
  %s12 = scalar_select 0, %s11, %s9
  loop: start=0, step=1, limit=4
  $region2: #{tpu_custom_call.1} parent=0 // loop_pre_header
    _
  $region3: #{tpu_custom_call.1} parent=0 // loop_header
    %s14 = sphi 0, %s18
    %p15 = scmp.ge.s32.totalorder %s14, 4
    %s24 = sphi 0, %s26
    %s27 = sphi 0, %s24
    %s28 = sphi 0, %s27
    %s44 = sphi 0, %s28
    %s48 = sphi 0, %s48
    %s50 = sphi 0, %s48
    %s51 = sphi 0, %s50
    %s65 = sphi 0, %s51
    %s69 = sphi 0, %s69
    %s71 = sphi 0, %s69
    %s72 = sphi 0, %s71
    %s86 = sphi 0, %s72
    %s90 = sphi 0, %s90
    %s92 = sphi 0, %s90
    %s93 = sphi 0, %s92
    %s107 = sphi 0, %s93
    %s111 = sphi 0, %s111
    %s113 = sphi 0, %s111
    %s114 = sphi 0, %s113
    %s128 = sphi 0, %s114
    %s132 = sphi 0, %s132
    %s134 = sphi 0, %s132
    %s135 = sphi 0, %s134
    %s149 = sphi 0, %s135
    %s153 = sphi 0, %s153
    %s155 = sphi 0, %s153
    %s156 = sphi 0, %s155
    %s170 = sphi 0, %s156
    %s174 = sphi 0, %s174
    %s176 = sphi 0, %s174
    %s177 = sphi 0, %s176
    %s191 = sphi 0, %s177
    %s197 = sphi 0, %s199
    %s200 = sphi 0, %s197
    %s201 = sphi 0, %s200
    %s217 = sphi 0, %s201
  $region4: #{tpu_custom_call.1} parent=0 // loop_header_branch
    %17 = sbr.rel (%p15) target = $region8
  $region5: #{tpu_custom_call.1} parent=0 // loop_body
    %s19 = ssub.s32 %s14, 1
    %s20 = ssub.s32 %s14, 2
    %s21 = sadd.s32 %s14, 1
    %s22 = ssub.s32 %s14, %s21
    %p23 = scmp.eq.s32.totalorder %s22, 0
    %s25 = sadd.s32 %s24, 1
    %s26 = scalar_select %p23, %s24, %s25
    %p29 = pneg %p23
    %p30 = scmp.eq.s32.totalorder %s14, 1
    %p31 = por %p29, %p30
    %p32 = scmp.ne.s32.totalorder %s24, %s27
    %p33 = scmp.eq.s32.totalorder %s14, 0
    %p34 = por %p32, %p33
    %p35 = scmp.ne.s32.totalorder %s24, %s27
    %p36 = scmp.eq.s32.totalorder %s19, 1
    %p37 = por %p35, %p36
    %p38 = scmp.ne.s32.totalorder %s27, %s28
    %p39 = scmp.eq.s32.totalorder %s19, 0
    %p40 = por %p38, %p39
    %p41 = scmp.ne.s32.totalorder %s27, %s28
    %p42 = scmp.eq.s32.totalorder %s20, 1
    %p43 = por %p41, %p42
    %p45 = scmp.ne.s32.totalorder %s28, %s44
    %p46 = scmp.eq.s32.totalorder %s20, 0
    %p47 = por %p45, %p46
    %s49 = sadd.s32 %s48, 1
    %p52 = scmp.eq.s32.totalorder %s14, 1
    %p53 = scmp.ne.s32.totalorder %s48, %s50
    %p54 = scmp.eq.s32.totalorder %s14, 0
    %p55 = por %p53, %p54
    %p56 = scmp.ne.s32.totalorder %s48, %s50
    %p57 = scmp.eq.s32.totalorder %s19, 1
    %p58 = por %p56, %p57
    %p59 = scmp.ne.s32.totalorder %s50, %s51
    %p60 = scmp.eq.s32.totalorder %s19, 0
    %p61 = por %p59, %p60
    %p62 = scmp.ne.s32.totalorder %s50, %s51
    %p63 = scmp.eq.s32.totalorder %s20, 1
    %p64 = por %p62, %p63
    %p66 = scmp.ne.s32.totalorder %s51, %s65
    %p67 = scmp.eq.s32.totalorder %s20, 0
    %p68 = por %p66, %p67
    %s70 = sadd.s32 %s69, 1
    %p73 = scmp.eq.s32.totalorder %s14, 1
    %p74 = scmp.ne.s32.totalorder %s69, %s71
    %p75 = scmp.eq.s32.totalorder %s14, 0
    %p76 = por %p74, %p75
    %p77 = scmp.ne.s32.totalorder %s69, %s71
    %p78 = scmp.eq.s32.totalorder %s19, 1
    %p79 = por %p77, %p78
    %p80 = scmp.ne.s32.totalorder %s71, %s72
    %p81 = scmp.eq.s32.totalorder %s19, 0
    %p82 = por %p80, %p81
    %p83 = scmp.ne.s32.totalorder %s71, %s72
    %p84 = scmp.eq.s32.totalorder %s20, 1
    %p85 = por %p83, %p84
    %p87 = scmp.ne.s32.totalorder %s72, %s86
    %p88 = scmp.eq.s32.totalorder %s20, 0
    %p89 = por %p87, %p88
    %s91 = sadd.s32 %s90, 1
    %p94 = scmp.eq.s32.totalorder %s14, 1
    %p95 = scmp.ne.s32.totalorder %s90, %s92
    %p96 = scmp.eq.s32.totalorder %s14, 0
    %p97 = por %p95, %p96
    %p98 = scmp.ne.s32.totalorder %s90, %s92
    %p99 = scmp.eq.s32.totalorder %s19, 1
    %p100 = por %p98, %p99
    %p101 = scmp.ne.s32.totalorder %s92, %s93
    %p102 = scmp.eq.s32.totalorder %s19, 0
    %p103 = por %p101, %p102
    %p104 = scmp.ne.s32.totalorder %s92, %s93
    %p105 = scmp.eq.s32.totalorder %s20, 1
    %p106 = por %p104, %p105
    %p108 = scmp.ne.s32.totalorder %s93, %s107
    %p109 = scmp.eq.s32.totalorder %s20, 0
    %p110 = por %p108, %p109
    %s112 = sadd.s32 %s111, 1
    %p115 = scmp.eq.s32.totalorder %s14, 1
    %p116 = scmp.ne.s32.totalorder %s111, %s113
    %p117 = scmp.eq.s32.totalorder %s14, 0
    %p118 = por %p116, %p117
    %p119 = scmp.ne.s32.totalorder %s111, %s113
    %p120 = scmp.eq.s32.totalorder %s19, 1
    %p121 = por %p119, %p120
    %p122 = scmp.ne.s32.totalorder %s113, %s114
    %p123 = scmp.eq.s32.totalorder %s19, 0
    %p124 = por %p122, %p123
    %p125 = scmp.ne.s32.totalorder %s113, %s114
    %p126 = scmp.eq.s32.totalorder %s20, 1
    %p127 = por %p125, %p126
    %p129 = scmp.ne.s32.totalorder %s114, %s128
    %p130 = scmp.eq.s32.totalorder %s20, 0
    %p131 = por %p129, %p130
    %s133 = sadd.s32 %s132, 1
    %p136 = scmp.eq.s32.totalorder %s14, 1
    %p137 = scmp.ne.s32.totalorder %s132, %s134
    %p138 = scmp.eq.s32.totalorder %s14, 0
    %p139 = por %p137, %p138
    %p140 = scmp.ne.s32.totalorder %s132, %s134
    %p141 = scmp.eq.s32.totalorder %s19, 1
    %p142 = por %p140, %p141
    %p143 = scmp.ne.s32.totalorder %s134, %s135
    %p144 = scmp.eq.s32.totalorder %s19, 0
    %p145 = por %p143, %p144
    %p146 = scmp.ne.s32.totalorder %s134, %s135
    %p147 = scmp.eq.s32.totalorder %s20, 1
    %p148 = por %p146, %p147
    %p150 = scmp.ne.s32.totalorder %s135, %s149
    %p151 = scmp.eq.s32.totalorder %s20, 0
    %p152 = por %p150, %p151
    %s154 = sadd.s32 %s153, 1
    %p157 = scmp.eq.s32.totalorder %s14, 1
    %p158 = scmp.ne.s32.totalorder %s153, %s155
    %p159 = scmp.eq.s32.totalorder %s14, 0
    %p160 = por %p158, %p159
    %p161 = scmp.ne.s32.totalorder %s153, %s155
    %p162 = scmp.eq.s32.totalorder %s19, 1
    %p163 = por %p161, %p162
    %p164 = scmp.ne.s32.totalorder %s155, %s156
    %p165 = scmp.eq.s32.totalorder %s19, 0
    %p166 = por %p164, %p165
    %p167 = scmp.ne.s32.totalorder %s155, %s156
    %p168 = scmp.eq.s32.totalorder %s20, 1
    %p169 = por %p167, %p168
    %p171 = scmp.ne.s32.totalorder %s156, %s170
    %p172 = scmp.eq.s32.totalorder %s20, 0
    %p173 = por %p171, %p172
    %s175 = sadd.s32 %s174, 1
    %p178 = scmp.eq.s32.totalorder %s14, 1
    %p179 = scmp.ne.s32.totalorder %s174, %s176
    %p180 = scmp.eq.s32.totalorder %s14, 0
    %p181 = por %p179, %p180
    %p182 = scmp.ne.s32.totalorder %s174, %s176
    %p183 = scmp.eq.s32.totalorder %s19, 1
    %p184 = por %p182, %p183
    %p185 = scmp.ne.s32.totalorder %s176, %s177
    %p186 = scmp.eq.s32.totalorder %s19, 0
    %p187 = por %p185, %p186
    %p188 = scmp.ne.s32.totalorder %s176, %s177
    %p189 = scmp.eq.s32.totalorder %s20, 1
    %p190 = por %p188, %p189
    %p192 = scmp.ne.s32.totalorder %s177, %s191
    %p193 = scmp.eq.s32.totalorder %s20, 0
    %p194 = por %p192, %p193
    %s195 = ssub.s32 %s14, %s21
    %p196 = scmp.eq.s32.totalorder %s195, 0
    %s198 = sadd.s32 %s197, 1
    %s199 = scalar_select %p196, %s197, %s198
    %p202 = pneg %p196
    %p203 = scmp.eq.s32.totalorder %s14, 1
    %p204 = por %p202, %p203
    %p205 = scmp.ne.s32.totalorder %s197, %s200
    %p206 = scmp.eq.s32.totalorder %s14, 0
    %p207 = por %p205, %p206
    %p208 = scmp.ne.s32.totalorder %s197, %s200
    %p209 = scmp.eq.s32.totalorder %s19, 1
    %p210 = por %p208, %p209
    %p211 = scmp.ne.s32.totalorder %s200, %s201
    %p212 = scmp.eq.s32.totalorder %s19, 0
    %p213 = por %p211, %p212
    %p214 = scmp.ne.s32.totalorder %s200, %s201
    %p215 = scmp.eq.s32.totalorder %s20, 1
    %p216 = por %p214, %p215
    %p218 = scmp.ne.s32.totalorder %s201, %s217
    %p219 = scmp.eq.s32.totalorder %s20, 0
    %p220 = por %p218, %p219
    %p221 = scmp.le.s32.totalorder 1, %s14
    %p222 = scmp.lt.s32.totalorder %s14, 3
    %p223 = pnand %p221, %p222
    %p224 = pneg %p223
    // Predicated region
    $region9: #{tpu_custom_call.1} parent=5 // pred_check
      _
    $region10: #{tpu_custom_call.1} parent=5 // pred_check_branch
      %226 = sbr.rel (%p223) target = $region12
    $region11: #{tpu_custom_call.1} parent=5 // pred_region
      %s227 = ssub.s32 %s14, 1
      // Predicated region
      $region13: #{tpu_custom_call.1} parent=11 // pred_check
        %p228 = pneg %p61
      $region14: #{tpu_custom_call.1} parent=11 // pred_check_branch
        %230 = sbr.rel (%p228) target = $region16
      $region15: #{tpu_custom_call.1} parent=11 // pred_region
        _
      $region16: #{tpu_custom_call.1} parent=11 // pred_fallthru
        _
      // Predicated region
      $region17: #{tpu_custom_call.1} parent=11 // pred_check
        %p231 = pneg %p82
      $region18: #{tpu_custom_call.1} parent=11 // pred_check_branch
        %233 = sbr.rel (%p231) target = $region20
      $region19: #{tpu_custom_call.1} parent=11 // pred_region
        _
      $region20: #{tpu_custom_call.1} parent=11 // pred_fallthru
        _
      // Predicated region
      $region21: #{tpu_custom_call.1} parent=11 // pred_check
        %p234 = pneg %p103
      $region22: #{tpu_custom_call.1} parent=11 // pred_check_branch
        %236 = sbr.rel (%p234) target = $region24
      $region23: #{tpu_custom_call.1} parent=11 // pred_region
        _
      $region24: #{tpu_custom_call.1} parent=11 // pred_fallthru
        _
      // Predicated region
      $region25: #{tpu_custom_call.1} parent=11 // pred_check
        %p237 = pneg %p124
      $region26: #{tpu_custom_call.1} parent=11 // pred_check_branch
        %239 = sbr.rel (%p237) target = $region28
      $region27: #{tpu_custom_call.1} parent=11 // pred_region
        _
      $region28: #{tpu_custom_call.1} parent=11 // pred_fallthru
        _
      // Predicated region
      $region29: #{tpu_custom_call.1} parent=11 // pred_check
        %p240 = pneg %p145
      $region30: #{tpu_custom_call.1} parent=11 // pred_check_branch
        %242 = sbr.rel (%p240) target = $region32
      $region31: #{tpu_custom_call.1} parent=11 // pred_region
        _
      $region32: #{tpu_custom_call.1} parent=11 // pred_fallthru
        _
      // Predicated region
      $region33: #{tpu_custom_call.1} parent=11 // pred_check
        %p243 = pneg %p166
      $region34: #{tpu_custom_call.1} parent=11 // pred_check_branch
        %245 = sbr.rel (%p243) target = $region36
      $region35: #{tpu_custom_call.1} parent=11 // pred_region
        _
      $region36: #{tpu_custom_call.1} parent=11 // pred_fallthru
        _
      // Predicated region
      $region37: #{tpu_custom_call.1} parent=11 // pred_check
        %p246 = pneg %p187
      $region38: #{tpu_custom_call.1} parent=11 // pred_check_branch
        %248 = sbr.rel (%p246) target = $region40
      $region39: #{tpu_custom_call.1} parent=11 // pred_region
        _
      $region40: #{tpu_custom_call.1} parent=11 // pred_fallthru
        _
    $region12: #{tpu_custom_call.1} parent=5 // pred_fallthru
      _
    %p249 = scmp.lt.s32.totalorder %s14, 2
    // Predicated region
    $region41: #{tpu_custom_call.1} parent=5 // pred_check
      %p250 = pneg %p249
    $region42: #{tpu_custom_call.1} parent=5 // pred_check_branch
      %252 = sbr.rel (%p250) target = $region44
    $region43: #{tpu_custom_call.1} parent=5 // pred_region
      // Predicated region
      $region45: #{tpu_custom_call.1} parent=43 // pred_check
        %p253 = pneg %p34
      $region46: #{tpu_custom_call.1} parent=43 // pred_check_branch
        %255 = sbr.rel (%p253) target = $region48
      $region47: #{tpu_custom_call.1} parent=43 // pred_region
        %p256 = scmp.lt.s32.totalorder %s14, 1
        %s257 = scalar_select %p256, %s14, 1
        %s258 = smul.addr %s257, 41
        %s259 = smul.addr %s258, 8
        %s260 = scalar_lea.vmem %s0, %s259
      $region48: #{tpu_custom_call.1} parent=43 // pred_fallthru
        _
    $region44: #{tpu_custom_call.1} parent=5 // pred_fallthru
      _
    %p261 = scmp.le.s32.totalorder 1, %s14
    %p262 = scmp.lt.s32.totalorder %s14, 3
    %p263 = pnand %p261, %p262
    %p264 = pneg %p263
    // Predicated region
    $region49: #{tpu_custom_call.1} parent=5 // pred_check
      _
    $region50: #{tpu_custom_call.1} parent=5 // pred_check_branch
      %266 = sbr.rel (%p263) target = $region52
    $region51: #{tpu_custom_call.1} parent=5 // pred_region
      %s267 = ssub.s32 %s14, 1
      %p268 = scmp.lt.s32.totalorder %s19, 1
      %s269 = scalar_select %p268, %s19, 1
      %s270 = smul.addr %s269, 41
      %s271 = smul.addr %s270, 8
      %s272 = scalar_lea.vmem %s0, %s271
      %p273 = pneg %p40
      %p274 = pneg %p37
      %p275 = pneg %p61
      %p276 = pneg %p58
      %p277 = pneg %p82
      %p278 = pneg %p79
      %p279 = pneg %p103
      %p280 = pneg %p100
      %p281 = pneg %p124
      %p282 = pneg %p121
      %p283 = pneg %p145
      %p284 = pneg %p142
      %p285 = pneg %p166
      %p286 = pneg %p163
      %p287 = pneg %p187
      %p288 = pneg %p184
      %p289 = pneg %p213
      %p290 = pneg %p210
      %p291 = scmp.lt.s32.totalorder %s19, 1
      %s292 = scalar_select %p291, %s19, 1
      %s293 = smul.addr %s292, 9
      %s294 = smul.addr %s293, 8
      %s295 = scalar_lea.vmem %s8, %s294
      %p296 = scmp.lt.s32.totalorder %s19, 1
      %s297 = scalar_select %p296, %s19, 1
      %s298 = smul.addr %s297, 41
      %s299 = smul.addr %s298, 8
      %s300 = scalar_lea.vmem %s0, %s299
      %p301 = scmp.lt.s32.totalorder %s19, 1
      %s302 = scalar_select %p301, %s19, 1
      %s303 = smul.addr %s302, 9
      %s304 = smul.addr %s303, 8
      %s305 = scalar_lea.vmem %s8, %s304
      %v306 = vld [vmem:[%s300] sm:$0xff]
      %v307 = vld [vmem:[%s300 + $0x8] sm:$0xff]
      %v308 = vld [vmem:[%s300 + $0x10] sm:$0xff]
      %v309 = vld [vmem:[%s300 + $0x18] sm:$0xff]
      %v310 = vld [vmem:[%s300 + $0x20] sm:$0xff]
      %v311 = vld [vmem:[%s300 + $0x28] sm:$0xff]
      %v312 = vld [vmem:[%s300 + $0x30] sm:$0xff]
      %v313 = vld [vmem:[%s300 + $0x38] sm:$0xff]
      %v314 = vld [vmem:[%s300 + $0x40] sm:$0xff]
      %v315 = vld [vmem:[%s300 + $0x48] sm:$0xff]
      %v316 = vld [vmem:[%s300 + $0x50] sm:$0xff]
      %v317 = vld [vmem:[%s300 + $0x58] sm:$0xff]
      %v318 = vld [vmem:[%s300 + $0x60] sm:$0xff]
      %v319 = vld [vmem:[%s300 + $0x68] sm:$0xff]
      %v320 = vld [vmem:[%s300 + $0x70] sm:$0xff]
      %v321 = vld [vmem:[%s300 + $0x78] sm:$0xff]
      %v322 = vld [vmem:[%s300 + $0x80] sm:$0xff]
      %v323 = vld [vmem:[%s300 + $0x88] sm:$0xff]
      %v324 = vld [vmem:[%s300 + $0x90] sm:$0xff]
      %v325 = vld [vmem:[%s300 + $0x98] sm:$0xff]
      %v326 = vld [vmem:[%s300 + $0xa0] sm:$0xff]
      %v327 = vld [vmem:[%s300 + $0xa8] sm:$0xff]
      %v328 = vld [vmem:[%s300 + $0xb0] sm:$0xff]
      %v329 = vld [vmem:[%s300 + $0xb8] sm:$0xff]
      %v330 = vld [vmem:[%s300 + $0xc0] sm:$0xff]
      %v331 = vld [vmem:[%s300 + $0xc8] sm:$0xff]
      %v332 = vld [vmem:[%s300 + $0xd0] sm:$0xff]
      %v333 = vld [vmem:[%s300 + $0xd8] sm:$0xff]
      %v334 = vld [vmem:[%s300 + $0xe0] sm:$0xff]
      %v335 = vld [vmem:[%s300 + $0xe8] sm:$0xff]
      %v336 = vld [vmem:[%s300 + $0xf0] sm:$0xff]
      %v337 = vld [vmem:[%s300 + $0xf8] sm:$0xff]
      %v338 = vld [vmem:[%s300 + $0x100] sm:$0xff]
      %v339 = vld [vmem:[%s300 + $0x108] sm:$0xff]
      %v340 = vld [vmem:[%s300 + $0x110] sm:$0xff]
      %v341 = vld [vmem:[%s300 + $0x118] sm:$0xff]
      %v342 = vld [vmem:[%s300 + $0x120] sm:$0xff]
      %v343 = vld [vmem:[%s300 + $0x128] sm:$0xff]
      %v344 = vld [vmem:[%s300 + $0x130] sm:$0xff]
      %v345 = vld [vmem:[%s300 + $0x138] sm:$0xff]
      %v346 = vld [vmem:[%s300 + $0x140] sm:$0xf]
      %v347 = vld [vmem:[%s2] sm:$0xff]
      %v348 = vld [vmem:[%s3] sm:$0x1]
      %v350 = vlaneseq
      %v351 = vshrl.u32 %v350, 7
      %v352 = vsub.s32 0, %v351
      %v353 = vrot.slane %v348, %v352
      %vm355 = vcmask 64512
      %v357 = vsel %vm355, %v306, 0
      %v360 = vsel %vm355, %v307, 0
      %v363 = vsel %vm355, %v308, 0
      %v366 = vsel %vm355, %v309, 0
      %v369 = vsel %vm355, %v310, 0
      %v372 = vsel %vm355, %v311, 0
      %v375 = vsel %vm355, %v312, 0
      %v378 = vsel %vm355, %v313, 0
      %v381 = vsel %vm355, %v314, 0
      %v384 = vsel %vm355, %v315, 0
      %v387 = vsel %vm355, %v316, 0
      %v390 = vsel %vm355, %v317, 0
      %v393 = vsel %vm355, %v318, 0
      %v396 = vsel %vm355, %v319, 0
      %v399 = vsel %vm355, %v320, 0
      %v402 = vsel %vm355, %v321, 0
      %v405 = vsel %vm355, %v322, 0
      %v408 = vsel %vm355, %v323, 0
      %v411 = vsel %vm355, %v324, 0
      %v414 = vsel %vm355, %v325, 0
      %v417 = vsel %vm355, %v326, 0
      %v420 = vsel %vm355, %v327, 0
      %v423 = vsel %vm355, %v328, 0
      %v426 = vsel %vm355, %v329, 0
      %v429 = vsel %vm355, %v330, 0
      %v432 = vsel %vm355, %v331, 0
      %v435 = vsel %vm355, %v332, 0
      %v438 = vsel %vm355, %v333, 0
      %v441 = vsel %vm355, %v334, 0
      %v444 = vsel %vm355, %v335, 0
      %v447 = vsel %vm355, %v336, 0
      %v450 = vsel %vm355, %v337, 0
      %v453 = vsel %vm355, %v338, 0
      %v456 = vsel %vm355, %v339, 0
      %v459 = vsel %vm355, %v340, 0
      %v462 = vsel %vm355, %v341, 0
      %v465 = vsel %vm355, %v342, 0
      %v468 = vsel %vm355, %v343, 0
      %v471 = vsel %vm355, %v344, 0
      %v474 = vsel %vm355, %v345, 0
      %v477 = vsel %vm355, %v346, 0
      %479 = vmatprep.subr.mxu0 0.0
      %480 = vmatpush1.msra.mxu0 %v347
      %481 = vmatprep.subr.mxu0 0.0
      %482 = vmatpush1.msra.mxu0 0.0
      %483 = vmatprep.subr.mxu0 0.0
      %484 = vmatpush1.msra.mxu0 0.0
      %485 = vmatprep.subr.mxu0 0.0
      %486 = vmatpush1.msra.mxu0 0.0
      %487 = vmatprep.subr.mxu0 0.0
      %488 = vmatpush1.msra.mxu0 0.0
      %489 = vmatprep.subr.mxu0 0.0
      %490 = vmatpush1.msra.mxu0 0.0
      %491 = vmatprep.subr.mxu0 0.0
      %492 = vmatpush1.msra.mxu0 0.0
      %493 = vmatprep.subr.mxu0 0.0
      %494 = vmatpush1.msra.mxu0 0.0
      %495 = vmatprep.subr.mxu0 0.0
      %496 = vmatpush1.msra.mxu0 0.0
      %497 = vmatprep.subr.mxu0 0.0
      %498 = vmatpush1.msra.mxu0 0.0
      %499 = vmatprep.subr.mxu0 0.0
      %500 = vmatpush1.msra.mxu0 0.0
      %501 = vmatprep.subr.mxu0 0.0
      %502 = vmatpush1.msra.mxu0 0.0
      %503 = vmatprep.subr.mxu0 0.0
      %504 = vmatpush1.msra.mxu0 0.0
      %505 = vmatprep.subr.mxu0 0.0
      %506 = vmatpush1.msra.mxu0 0.0
      %507 = vmatprep.subr.mxu0 0.0
      %508 = vmatpush1.msra.mxu0 0.0
      %509 = vmatprep.subr.mxu0 0.0
      %510 = vmatpush1.msra.mxu0 0.0
      %511 = vmatprep.subr.mxu0 0.0
      %512 = vmatpush1.msra.mxu0 0.0
      %513 = vmatprep.subr.mxu0 0.0
      %514 = vmatpush1.msra.mxu0 0.0
      %515 = vmatprep.subr.mxu0 0.0
      %516 = vmatpush1.msra.mxu0 0.0
      %517 = vmatprep.subr.mxu0 0.0
      %518 = vmatpush1.msra.mxu0 0.0
      %519 = vmatprep.subr.mxu0 0.0
      %520 = vmatpush1.msra.mxu0 0.0
      %521 = vmatprep.subr.mxu0 0.0
      %522 = vmatpush1.msra.mxu0 0.0
      %523 = vmatprep.subr.mxu0 0.0
      %524 = vmatpush1.msra.mxu0 0.0
      %525 = vmatprep.subr.mxu0 0.0
      %526 = vmatpush1.msra.mxu0 0.0
      %527 = vmatprep.subr.mxu0 0.0
      %528 = vmatpush1.msra.mxu0 0.0
      %529 = vmatprep.subr.mxu0 0.0
      %530 = vmatpush1.msra.mxu0 0.0
      %531 = vmatprep.subr.mxu0 0.0
      %532 = vmatpush1.msra.mxu0 0.0
      %533 = vmatprep.subr.mxu0 0.0
      %534 = vmatpush1.msra.mxu0 0.0
      %535 = vmatprep.subr.mxu0 0.0
      %536 = vmatpush1.msra.mxu0 0.0
      %537 = vmatprep.subr.mxu0 0.0
      %538 = vmatpush1.msra.mxu0 0.0
      %539 = vmatprep.subr.mxu0 0.0
      %540 = vmatpush1.msra.mxu0 0.0
      %541 = vmatprep.subr.mxu0 0.0
      %542 = vmatpush1.msra.mxu0 0.0
      %543 = vmatprep.mubr.f32.mxu0 0.0
      %544 = vmatmul.mubr.f32.gmra.mrb[0].mxu0 %v357
      %v545 = vpop.f32.mrb[0].mxu0
      %v546 = vadd.f32 %v353, %v545
      %v547 = vpop.f32.mrb[0].mxu0
      %548 = vmatprep.mubr.f32.mxu0 0.0
      %549 = vmatmul.mubr.f32.gmra.mrb[0].mxu0 %v360
      %v550 = vpop.f32.mrb[0].mxu0
      %v551 = vadd.f32 %v353, %v550
      %v552 = vpop.f32.mrb[0].mxu0
      %553 = vmatprep.mubr.f32.mxu0 0.0
      %554 = vmatmul.mubr.f32.gmra.mrb[0].mxu0 %v363
      %v555 = vpop.f32.mrb[0].mxu0
      %v556 = vadd.f32 %v353, %v555
      %v557 = vpop.f32.mrb[0].mxu0
      %558 = vmatprep.mubr.f32.mxu0 0.0
      %559 = vmatmul.mubr.f32.gmra.mrb[0].mxu0 %v366
      %v560 = vpop.f32.mrb[0].mxu0
      %v561 = vadd.f32 %v353, %v560
      %v562 = vpop.f32.mrb[0].mxu0
      %563 = vmatprep.mubr.f32.mxu0 0.0
      %564 = vmatmul.mubr.f32.gmra.mrb[0].mxu0 %v369
      %v565 = vpop.f32.mrb[0].mxu0
      %v566 = vadd.f32 %v353, %v565
      %v567 = vpop.f32.mrb[0].mxu0
      %568 = vmatprep.mubr.f32.mxu0 0.0
      %569 = vmatmul.mubr.f32.gmra.mrb[0].mxu0 %v372
      %v570 = vpop.f32.mrb[0].mxu0
      %v571 = vadd.f32 %v353, %v570
      %v572 = vpop.f32.mrb[0].mxu0
      %573 = vmatprep.mubr.f32.mxu0 0.0
      %574 = vmatmul.mubr.f32.gmra.mrb[0].mxu0 %v375
      %v575 = vpop.f32.mrb[0].mxu0
      %v576 = vadd.f32 %v353, %v575
      %v577 = vpop.f32.mrb[0].mxu0
      %578 = vmatprep.mubr.f32.mxu0 0.0
      %579 = vmatmul.mubr.f32.gmra.mrb[0].mxu0 %v378
      %v580 = vpop.f32.mrb[0].mxu0
      %v581 = vadd.f32 %v353, %v580
      %v582 = vpop.f32.mrb[0].mxu0
      %583 = vmatprep.mubr.f32.mxu0 0.0
      %584 = vmatmul.mubr.f32.gmra.mrb[0].mxu0 %v381
      %v585 = vpop.f32.mrb[0].mxu0
      %v586 = vadd.f32 %v353, %v585
      %v587 = vpop.f32.mrb[0].mxu0
      %588 = vmatprep.mubr.f32.mxu0 0.0
      %589 = vmatmul.mubr.f32.gmra.mrb[0].mxu0 %v384
      %v590 = vpop.f32.mrb[0].mxu0
      %v591 = vadd.f32 %v353, %v590
      %v592 = vpop.f32.mrb[0].mxu0
      %593 = vmatprep.mubr.f32.mxu0 0.0
      %594 = vmatmul.mubr.f32.gmra.mrb[0].mxu0 %v387
      %v595 = vpop.f32.mrb[0].mxu0
      %v596 = vadd.f32 %v353, %v595
      %v597 = vpop.f32.mrb[0].mxu0
      %598 = vmatprep.mubr.f32.mxu0 0.0
      %599 = vmatmul.mubr.f32.gmra.mrb[0].mxu0 %v390
      %v600 = vpop.f32.mrb[0].mxu0
      %v601 = vadd.f32 %v353, %v600
      %v602 = vpop.f32.mrb[0].mxu0
      %603 = vmatprep.mubr.f32.mxu0 0.0
      %604 = vmatmul.mubr.f32.gmra.mrb[0].mxu0 %v393
      %v605 = vpop.f32.mrb[0].mxu0
      %v606 = vadd.f32 %v353, %v605
      %v607 = vpop.f32.mrb[0].mxu0
      %608 = vmatprep.mubr.f32.mxu0 0.0
      %609 = vmatmul.mubr.f32.gmra.mrb[0].mxu0 %v396
      %v610 = vpop.f32.mrb[0].mxu0
      %v611 = vadd.f32 %v353, %v610
      %v612 = vpop.f32.mrb[0].mxu0
      %613 = vmatprep.mubr.f32.mxu0 0.0
      %614 = vmatmul.mubr.f32.gmra.mrb[0].mxu0 %v399
      %v615 = vpop.f32.mrb[0].mxu0
      %v616 = vadd.f32 %v353, %v615
      %v617 = vpop.f32.mrb[0].mxu0
      %618 = vmatprep.mubr.f32.mxu0 0.0
      %619 = vmatmul.mubr.f32.gmra.mrb[0].mxu0 %v402
      %v620 = vpop.f32.mrb[0].mxu0
      %v621 = vadd.f32 %v353, %v620
      %v622 = vpop.f32.mrb[0].mxu0
      %623 = vmatprep.mubr.f32.mxu0 0.0
      %624 = vmatmul.mubr.f32.gmra.mrb[0].mxu0 %v405
      %v625 = vpop.f32.mrb[0].mxu0
      %v626 = vadd.f32 %v353, %v625
      %v627 = vpop.f32.mrb[0].mxu0
      %628 = vmatprep.mubr.f32.mxu0 0.0
      %629 = vmatmul.mubr.f32.gmra.mrb[0].mxu0 %v408
      %v630 = vpop.f32.mrb[0].mxu0
      %v631 = vadd.f32 %v353, %v630
      %v632 = vpop.f32.mrb[0].mxu0
      %633 = vmatprep.mubr.f32.mxu0 0.0
      %634 = vmatmul.mubr.f32.gmra.mrb[0].mxu0 %v411
      %v635 = vpop.f32.mrb[0].mxu0
      %v636 = vadd.f32 %v353, %v635
      %v637 = vpop.f32.mrb[0].mxu0
      %638 = vmatprep.mubr.f32.mxu0 0.0
      %639 = vmatmul.mubr.f32.gmra.mrb[0].mxu0 %v414
      %v640 = vpop.f32.mrb[0].mxu0
      %v641 = vadd.f32 %v353, %v640
      %v642 = vpop.f32.mrb[0].mxu0
      %643 = vmatprep.mubr.f32.mxu0 0.0
      %644 = vmatmul.mubr.f32.gmra.mrb[0].mxu0 %v417
      %v645 = vpop.f32.mrb[0].mxu0
      %v646 = vadd.f32 %v353, %v645
      %v647 = vpop.f32.mrb[0].mxu0
      %648 = vmatprep.mubr.f32.mxu0 0.0
      %649 = vmatmul.mubr.f32.gmra.mrb[0].mxu0 %v420
      %v650 = vpop.f32.mrb[0].mxu0
      %v651 = vadd.f32 %v353, %v650
      %v652 = vpop.f32.mrb[0].mxu0
      %653 = vmatprep.mubr.f32.mxu0 0.0
      %654 = vmatmul.mubr.f32.gmra.mrb[0].mxu0 %v423
      %v655 = vpop.f32.mrb[0].mxu0
      %v656 = vadd.f32 %v353, %v655
      %v657 = vpop.f32.mrb[0].mxu0
      %658 = vmatprep.mubr.f32.mxu0 0.0
      %659 = vmatmul.mubr.f32.gmra.mrb[0].mxu0 %v426
      %v660 = vpop.f32.mrb[0].mxu0
      %v661 = vadd.f32 %v353, %v660
      %v662 = vpop.f32.mrb[0].mxu0
      %663 = vmatprep.mubr.f32.mxu0 0.0
      %664 = vmatmul.mubr.f32.gmra.mrb[0].mxu0 %v429
      %v665 = vpop.f32.mrb[0].mxu0
      %v666 = vadd.f32 %v353, %v665
      %v667 = vpop.f32.mrb[0].mxu0
      %668 = vmatprep.mubr.f32.mxu0 0.0
      %669 = vmatmul.mubr.f32.gmra.mrb[0].mxu0 %v432
      %v670 = vpop.f32.mrb[0].mxu0
      %v671 = vadd.f32 %v353, %v670
      %v672 = vpop.f32.mrb[0].mxu0
      %673 = vmatprep.mubr.f32.mxu0 0.0
      %674 = vmatmul.mubr.f32.gmra.mrb[0].mxu0 %v435
      %v675 = vpop.f32.mrb[0].mxu0
      %v676 = vadd.f32 %v353, %v675
      %v677 = vpop.f32.mrb[0].mxu0
      %678 = vmatprep.mubr.f32.mxu0 0.0
      %679 = vmatmul.mubr.f32.gmra.mrb[0].mxu0 %v438
      %v680 = vpop.f32.mrb[0].mxu0
      %v681 = vadd.f32 %v353, %v680
      %v682 = vpop.f32.mrb[0].mxu0
      %683 = vmatprep.mubr.f32.mxu0 0.0
      %684 = vmatmul.mubr.f32.gmra.mrb[0].mxu0 %v441
      %v685 = vpop.f32.mrb[0].mxu0
      %v686 = vadd.f32 %v353, %v685
      %v687 = vpop.f32.mrb[0].mxu0
      %688 = vmatprep.mubr.f32.mxu0 0.0
      %689 = vmatmul.mubr.f32.gmra.mrb[0].mxu0 %v444
      %v690 = vpop.f32.mrb[0].mxu0
      %v691 = vadd.f32 %v353, %v690
      %v692 = vpop.f32.mrb[0].mxu0
      %693 = vmatprep.mubr.f32.mxu0 0.0
      %694 = vmatmul.mubr.f32.gmra.mrb[0].mxu0 %v447
      %v695 = vpop.f32.mrb[0].mxu0
      %v696 = vadd.f32 %v353, %v695
      %v697 = vpop.f32.mrb[0].mxu0
      %698 = vmatprep.mubr.f32.mxu0 0.0
      %699 = vmatmul.mubr.f32.gmra.mrb[0].mxu0 %v450
      %v700 = vpop.f32.mrb[0].mxu0
      %v701 = vadd.f32 %v353, %v700
      %v702 = vpop.f32.mrb[0].mxu0
      %703 = vmatprep.mubr.f32.mxu0 0.0
      %704 = vmatmul.mubr.f32.gmra.mrb[0].mxu0 %v453
      %v705 = vpop.f32.mrb[0].mxu0
      %v706 = vadd.f32 %v353, %v705
      %v707 = vpop.f32.mrb[0].mxu0
      %708 = vmatprep.mubr.f32.mxu0 0.0
      %709 = vmatmul.mubr.f32.gmra.mrb[0].mxu0 %v456
      %v710 = vpop.f32.mrb[0].mxu0
      %v711 = vadd.f32 %v353, %v710
      %v712 = vpop.f32.mrb[0].mxu0
      %713 = vmatprep.mubr.f32.mxu0 0.0
      %714 = vmatmul.mubr.f32.gmra.mrb[0].mxu0 %v459
      %v715 = vpop.f32.mrb[0].mxu0
      %v716 = vadd.f32 %v353, %v715
      %v717 = vpop.f32.mrb[0].mxu0
      %718 = vmatprep.mubr.f32.mxu0 0.0
      %719 = vmatmul.mubr.f32.gmra.mrb[0].mxu0 %v462
      %v720 = vpop.f32.mrb[0].mxu0
      %v721 = vadd.f32 %v353, %v720
      %v722 = vpop.f32.mrb[0].mxu0
      %723 = vmatprep.mubr.f32.mxu0 0.0
      %724 = vmatmul.mubr.f32.gmra.mrb[0].mxu0 %v465
      %v725 = vpop.f32.mrb[0].mxu0
      %v726 = vadd.f32 %v353, %v725
      %v727 = vpop.f32.mrb[0].mxu0
      %728 = vmatprep.mubr.f32.mxu0 0.0
      %729 = vmatmul.mubr.f32.gmra.mrb[0].mxu0 %v468
      %v730 = vpop.f32.mrb[0].mxu0
      %v731 = vadd.f32 %v353, %v730
      %v732 = vpop.f32.mrb[0].mxu0
      %733 = vmatprep.mubr.f32.mxu0 0.0
      %734 = vmatmul.mubr.f32.gmra.mrb[0].mxu0 %v471
      %v735 = vpop.f32.mrb[0].mxu0
      %v736 = vadd.f32 %v353, %v735
      %v737 = vpop.f32.mrb[0].mxu0
      %738 = vmatprep.mubr.f32.mxu0 0.0
      %739 = vmatmul.mubr.f32.gmra.mrb[0].mxu0 %v474
      %v740 = vpop.f32.mrb[0].mxu0
      %v741 = vadd.f32 %v353, %v740
      %v742 = vpop.f32.mrb[0].mxu0
      %743 = vmatprep.mubr.f32.mxu0 0.0
      %744 = vmatmul.mubr.f32.gmra.mrb[0].mxu0 %v477
      %v745 = vpop.f32.mrb[0].mxu0
      %v746 = vadd.f32 %v353, %v745
      %v747 = vpop.f32.mrb[0].mxu0
      %748 = vdwg.mxu0
      %v749 = vmax.f32 %v546, 0.0
      %v750 = vmax.f32 %v551, 0.0
      %v751 = vmax.f32 %v556, 0.0
      %v752 = vmax.f32 %v561, 0.0
      %v753 = vmax.f32 %v566, 0.0
      %v754 = vmax.f32 %v571, 0.0
      %v755 = vmax.f32 %v576, 0.0
      %v756 = vmax.f32 %v581, 0.0
      %v757 = vmax.f32 %v586, 0.0
      %v758 = vmax.f32 %v591, 0.0
      %v759 = vmax.f32 %v596, 0.0
      %v760 = vmax.f32 %v601, 0.0
      %v761 = vmax.f32 %v606, 0.0
      %v762 = vmax.f32 %v611, 0.0
      %v763 = vmax.f32 %v616, 0.0
      %v764 = vmax.f32 %v621, 0.0
      %v765 = vmax.f32 %v626, 0.0
      %v766 = vmax.f32 %v631, 0.0
      %v767 = vmax.f32 %v636, 0.0
      %v768 = vmax.f32 %v641, 0.0
      %v769 = vmax.f32 %v646, 0.0
      %v770 = vmax.f32 %v651, 0.0
      %v771 = vmax.f32 %v656, 0.0
      %v772 = vmax.f32 %v661, 0.0
      %v773 = vmax.f32 %v666, 0.0
      %v774 = vmax.f32 %v671, 0.0
      %v775 = vmax.f32 %v676, 0.0
      %v776 = vmax.f32 %v681, 0.0
      %v777 = vmax.f32 %v686, 0.0
      %v778 = vmax.f32 %v691, 0.0
      %v779 = vmax.f32 %v696, 0.0
      %v780 = vmax.f32 %v701, 0.0
      %v781 = vmax.f32 %v706, 0.0
      %v782 = vmax.f32 %v711, 0.0
      %v783 = vmax.f32 %v716, 0.0
      %v784 = vmax.f32 %v721, 0.0
      %v785 = vmax.f32 %v726, 0.0
      %v786 = vmax.f32 %v731, 0.0
      %v787 = vmax.f32 %v736, 0.0
      %v788 = vmax.f32 %v741, 0.0
      %v789 = vmax.f32 %v746, 0.0
      %v790 = vld [vmem:[%s1] sm:$0xff]
      %v791 = vld [vmem:[%s1 + $0x8] sm:$0xff]
      %v792 = vld [vmem:[%s1 + $0x10] sm:$0xff]
      %v793 = vld [vmem:[%s1 + $0x18] sm:$0xff]
      %v794 = vld [vmem:[%s1 + $0x20] sm:$0xff]
      %v795 = vld [vmem:[%s1 + $0x28] sm:$0xff]
      %v796 = vld [vmem:[%s1 + $0x30] sm:$0xff]
      %v797 = vld [vmem:[%s1 + $0x38] sm:$0xff]
      %v798 = vld [vmem:[%s1 + $0x40] sm:$0xff]
      %v799 = vld [vmem:[%s1 + $0x48] sm:$0xff]
      %v800 = vld [vmem:[%s1 + $0x50] sm:$0xff]
      %v801 = vld [vmem:[%s1 + $0x58] sm:$0xff]
      %v802 = vld [vmem:[%s1 + $0x60] sm:$0xff]
      %v803 = vld [vmem:[%s1 + $0x68] sm:$0xff]
      %v804 = vld [vmem:[%s1 + $0x70] sm:$0xff]
      %v805 = vld [vmem:[%s1 + $0x78] sm:$0xff]
      %v806 = vld [vmem:[%s1 + $0x80] sm:$0xff]
      %v807 = vld [vmem:[%s1 + $0x88] sm:$0xff]
      %v808 = vld [vmem:[%s1 + $0x90] sm:$0xff]
      %v809 = vld [vmem:[%s1 + $0x98] sm:$0xff]
      %v810 = vld [vmem:[%s1 + $0xa0] sm:$0xff]
      %v811 = vld [vmem:[%s1 + $0xa8] sm:$0xff]
      %v812 = vld [vmem:[%s1 + $0xb0] sm:$0xff]
      %v813 = vld [vmem:[%s1 + $0xb8] sm:$0xff]
      %v814 = vld [vmem:[%s1 + $0xc0] sm:$0xff]
      %v815 = vld [vmem:[%s1 + $0xc8] sm:$0xff]
      %v816 = vld [vmem:[%s1 + $0xd0] sm:$0xff]
      %v817 = vld [vmem:[%s1 + $0xd8] sm:$0xff]
      %v818 = vld [vmem:[%s1 + $0xe0] sm:$0xff]
      %v819 = vld [vmem:[%s1 + $0xe8] sm:$0xff]
      %v820 = vld [vmem:[%s1 + $0xf0] sm:$0xff]
      %v821 = vld [vmem:[%s1 + $0xf8] sm:$0xff]
      %v822 = vld [vmem:[%s1 + $0x100] sm:$0xff]
      %v823 = vld [vmem:[%s1 + $0x108] sm:$0xff]
      %v824 = vld [vmem:[%s1 + $0x110] sm:$0xff]
      %v825 = vld [vmem:[%s1 + $0x118] sm:$0xff]
      %v826 = vld [vmem:[%s1 + $0x120] sm:$0xff]
      %v827 = vld [vmem:[%s1 + $0x128] sm:$0xff]
      %v828 = vld [vmem:[%s1 + $0x130] sm:$0xff]
      %v829 = vld [vmem:[%s1 + $0x138] sm:$0xff]
      %v830 = vld [vmem:[%s1 + $0x140] sm:$0xf]
      %832 = vset.pattern.permute.xlu0 0
      %833 = vperm.xlu0 %832, %v790
      %v834 = vpop.permute.xlu0 %833
      %837 = vset.pattern.permute.xlu0 0
      %838 = vperm.xlu0 %837, %v791
      %v839 = vpop.permute.xlu0 %838
      %842 = vset.pattern.permute.xlu0 0
      %843 = vperm.xlu0 %842, %v792
      %v844 = vpop.permute.xlu0 %843
      %847 = vset.pattern.permute.xlu0 0
      %848 = vperm.xlu0 %847, %v793
      %v849 = vpop.permute.xlu0 %848
      %852 = vset.pattern.permute.xlu0 0
      %853 = vperm.xlu0 %852, %v794
      %v854 = vpop.permute.xlu0 %853
      %857 = vset.pattern.permute.xlu0 0
      %858 = vperm.xlu0 %857, %v795
      %v859 = vpop.permute.xlu0 %858
      %862 = vset.pattern.permute.xlu0 0
      %863 = vperm.xlu0 %862, %v796
      %v864 = vpop.permute.xlu0 %863
      %867 = vset.pattern.permute.xlu0 0
      %868 = vperm.xlu0 %867, %v797
      %v869 = vpop.permute.xlu0 %868
      %872 = vset.pattern.permute.xlu0 0
      %873 = vperm.xlu0 %872, %v798
      %v874 = vpop.permute.xlu0 %873
      %877 = vset.pattern.permute.xlu0 0
      %878 = vperm.xlu0 %877, %v799
      %v879 = vpop.permute.xlu0 %878
      %882 = vset.pattern.permute.xlu0 0
      %883 = vperm.xlu0 %882, %v800
      %v884 = vpop.permute.xlu0 %883
      %887 = vset.pattern.permute.xlu0 0
      %888 = vperm.xlu0 %887, %v801
      %v889 = vpop.permute.xlu0 %888
      %892 = vset.pattern.permute.xlu0 0
      %893 = vperm.xlu0 %892, %v802
      %v894 = vpop.permute.xlu0 %893
      %897 = vset.pattern.permute.xlu0 0
      %898 = vperm.xlu0 %897, %v803
      %v899 = vpop.permute.xlu0 %898
      %902 = vset.pattern.permute.xlu0 0
      %903 = vperm.xlu0 %902, %v804
      %v904 = vpop.permute.xlu0 %903
      %907 = vset.pattern.permute.xlu0 0
      %908 = vperm.xlu0 %907, %v805
      %v909 = vpop.permute.xlu0 %908
      %912 = vset.pattern.permute.xlu0 0
      %913 = vperm.xlu0 %912, %v806
      %v914 = vpop.permute.xlu0 %913
      %917 = vset.pattern.permute.xlu0 0
      %918 = vperm.xlu0 %917, %v807
      %v919 = vpop.permute.xlu0 %918
      %922 = vset.pattern.permute.xlu0 0
      %923 = vperm.xlu0 %922, %v808
      %v924 = vpop.permute.xlu0 %923
      %927 = vset.pattern.permute.xlu0 0
      %928 = vperm.xlu0 %927, %v809
      %v929 = vpop.permute.xlu0 %928
      %932 = vset.pattern.permute.xlu0 0
      %933 = vperm.xlu0 %932, %v810
      %v934 = vpop.permute.xlu0 %933
      %937 = vset.pattern.permute.xlu0 0
      %938 = vperm.xlu0 %937, %v811
      %v939 = vpop.permute.xlu0 %938
      %942 = vset.pattern.permute.xlu0 0
      %943 = vperm.xlu0 %942, %v812
      %v944 = vpop.permute.xlu0 %943
      %947 = vset.pattern.permute.xlu0 0
      %948 = vperm.xlu0 %947, %v813
      %v949 = vpop.permute.xlu0 %948
      %952 = vset.pattern.permute.xlu0 0
      %953 = vperm.xlu0 %952, %v814
      %v954 = vpop.permute.xlu0 %953
      %957 = vset.pattern.permute.xlu0 0
      %958 = vperm.xlu0 %957, %v815
      %v959 = vpop.permute.xlu0 %958
      %962 = vset.pattern.permute.xlu0 0
      %963 = vperm.xlu0 %962, %v816
      %v964 = vpop.permute.xlu0 %963
      %967 = vset.pattern.permute.xlu0 0
      %968 = vperm.xlu0 %967, %v817
      %v969 = vpop.permute.xlu0 %968
      %972 = vset.pattern.permute.xlu0 0
      %973 = vperm.xlu0 %972, %v818
      %v974 = vpop.permute.xlu0 %973
      %977 = vset.pattern.permute.xlu0 0
      %978 = vperm.xlu0 %977, %v819
      %v979 = vpop.permute.xlu0 %978
      %982 = vset.pattern.permute.xlu0 0
      %983 = vperm.xlu0 %982, %v820
      %v984 = vpop.permute.xlu0 %983
      %987 = vset.pattern.permute.xlu0 0
      %988 = vperm.xlu0 %987, %v821
      %v989 = vpop.permute.xlu0 %988
      %992 = vset.pattern.permute.xlu0 0
      %993 = vperm.xlu0 %992, %v822
      %v994 = vpop.permute.xlu0 %993
      %997 = vset.pattern.permute.xlu0 0
      %998 = vperm.xlu0 %997, %v823
      %v999 = vpop.permute.xlu0 %998
      %1002 = vset.pattern.permute.xlu0 0
      %1003 = vperm.xlu0 %1002, %v824
      %v1004 = vpop.permute.xlu0 %1003
      %1007 = vset.pattern.permute.xlu0 0
      %1008 = vperm.xlu0 %1007, %v825
      %v1009 = vpop.permute.xlu0 %1008
      %1012 = vset.pattern.permute.xlu0 0
      %1013 = vperm.xlu0 %1012, %v826
      %v1014 = vpop.permute.xlu0 %1013
      %1017 = vset.pattern.permute.xlu0 0
      %1018 = vperm.xlu0 %1017, %v827
      %v1019 = vpop.permute.xlu0 %1018
      %1022 = vset.pattern.permute.xlu0 0
      %1023 = vperm.xlu0 %1022, %v828
      %v1024 = vpop.permute.xlu0 %1023
      %1027 = vset.pattern.permute.xlu0 0
      %1028 = vperm.xlu0 %1027, %v829
      %v1029 = vpop.permute.xlu0 %1028
      %1032 = vset.pattern.permute.xlu0 0
      %1033 = vperm.xlu0 %1032, %v830
      %v1034 = vpop.permute.xlu0 %1033
      %v1036 = vmul.f32 %v749, %v834
      %v1037 = vmul.f32 %v750, %v839
      %v1038 = vmul.f32 %v751, %v844
      %v1039 = vmul.f32 %v752, %v849
      %v1040 = vmul.f32 %v753, %v854
      %v1041 = vmul.f32 %v754, %v859
      %v1042 = vmul.f32 %v755, %v864
      %v1043 = vmul.f32 %v756, %v869
      %v1044 = vmul.f32 %v757, %v874
      %v1045 = vmul.f32 %v758, %v879
      %v1046 = vmul.f32 %v759, %v884
      %v1047 = vmul.f32 %v760, %v889
      %v1048 = vmul.f32 %v761, %v894
      %v1049 = vmul.f32 %v762, %v899
      %v1050 = vmul.f32 %v763, %v904
      %v1051 = vmul.f32 %v764, %v909
      %v1052 = vmul.f32 %v765, %v914
      %v1053 = vmul.f32 %v766, %v919
      %v1054 = vmul.f32 %v767, %v924
      %v1055 = vmul.f32 %v768, %v929
      %v1056 = vmul.f32 %v769, %v934
      %v1057 = vmul.f32 %v770, %v939
      %v1058 = vmul.f32 %v771, %v944
      %v1059 = vmul.f32 %v772, %v949
      %v1060 = vmul.f32 %v773, %v954
      %v1061 = vmul.f32 %v774, %v959
      %v1062 = vmul.f32 %v775, %v964
      %v1063 = vmul.f32 %v776, %v969
      %v1064 = vmul.f32 %v777, %v974
      %v1065 = vmul.f32 %v778, %v979
      %v1066 = vmul.f32 %v779, %v984
      %v1067 = vmul.f32 %v780, %v989
      %v1068 = vmul.f32 %v781, %v994
      %v1069 = vmul.f32 %v782, %v999
      %v1070 = vmul.f32 %v783, %v1004
      %v1071 = vmul.f32 %v784, %v1009
      %v1072 = vmul.f32 %v785, %v1014
      %v1073 = vmul.f32 %v786, %v1019
      %v1074 = vmul.f32 %v787, %v1024
      %v1075 = vmul.f32 %v788, %v1029
      %v1076 = vmul.f32 %v789, %v1034
      %vm1077 = vcmask 31744
      %1078 = vst.msk [vmem:[#allocation2] sm:$0xff] %vm1077, %v1036
      %1079 = vst.msk [vmem:[#allocation2 + $0x8] sm:$0xff] %vm1077, %v1037
      %1080 = vst.msk [vmem:[#allocation2 + $0x10] sm:$0xff] %vm1077, %v1038
      %1081 = vst.msk [vmem:[#allocation2 + $0x18] sm:$0xff] %vm1077, %v1039
      %1082 = vst.msk [vmem:[#allocation2 + $0x20] sm:$0xff] %vm1077, %v1040
      %1083 = vst.msk [vmem:[#allocation2 + $0x28] sm:$0xff] %vm1077, %v1041
      %1084 = vst.msk [vmem:[#allocation2 + $0x30] sm:$0xff] %vm1077, %v1042
      %1085 = vst.msk [vmem:[#allocation2 + $0x38] sm:$0xff] %vm1077, %v1043
      %1086 = vst.msk [vmem:[#allocation2 + $0x40] sm:$0xff] %vm1077, %v1044
      %1087 = vst.msk [vmem:[#allocation2 + $0x48] sm:$0xff] %vm1077, %v1045
      %1088 = vst.msk [vmem:[#allocation2 + $0x50] sm:$0xff] %vm1077, %v1046
      %1089 = vst.msk [vmem:[#allocation2 + $0x58] sm:$0xff] %vm1077, %v1047
      %1090 = vst.msk [vmem:[#allocation2 + $0x60] sm:$0xff] %vm1077, %v1048
      %1091 = vst.msk [vmem:[#allocation2 + $0x68] sm:$0xff] %vm1077, %v1049
      %1092 = vst.msk [vmem:[#allocation2 + $0x70] sm:$0xff] %vm1077, %v1050
      %1093 = vst.msk [vmem:[#allocation2 + $0x78] sm:$0xff] %vm1077, %v1051
      %1094 = vst.msk [vmem:[#allocation2 + $0x80] sm:$0xff] %vm1077, %v1052
      %1095 = vst.msk [vmem:[#allocation2 + $0x88] sm:$0xff] %vm1077, %v1053
      %1096 = vst.msk [vmem:[#allocation2 + $0x90] sm:$0xff] %vm1077, %v1054
      %1097 = vst.msk [vmem:[#allocation2 + $0x98] sm:$0xff] %vm1077, %v1055
      %1098 = vst.msk [vmem:[#allocation2 + $0xa0] sm:$0xff] %vm1077, %v1056
      %1099 = vst.msk [vmem:[#allocation2 + $0xa8] sm:$0xff] %vm1077, %v1057
      %1100 = vst.msk [vmem:[#allocation2 + $0xb0] sm:$0xff] %vm1077, %v1058
      %1101 = vst.msk [vmem:[#allocation2 + $0xb8] sm:$0xff] %vm1077, %v1059
      %1102 = vst.msk [vmem:[#allocation2 + $0xc0] sm:$0xff] %vm1077, %v1060
      %1103 = vst.msk [vmem:[#allocation2 + $0xc8] sm:$0xff] %vm1077, %v1061
      %1104 = vst.msk [vmem:[#allocation2 + $0xd0] sm:$0xff] %vm1077, %v1062
      %1105 = vst.msk [vmem:[#allocation2 + $0xd8] sm:$0xff] %vm1077, %v1063
      %1106 = vst.msk [vmem:[#allocation2 + $0xe0] sm:$0xff] %vm1077, %v1064
      %1107 = vst.msk [vmem:[#allocation2 + $0xe8] sm:$0xff] %vm1077, %v1065
      %1108 = vst.msk [vmem:[#allocation2 + $0xf0] sm:$0xff] %vm1077, %v1066
      %1109 = vst.msk [vmem:[#allocation2 + $0xf8] sm:$0xff] %vm1077, %v1067
      %1110 = vst.msk [vmem:[#allocation2 + $0x100] sm:$0xff] %vm1077, %v1068
      %1111 = vst.msk [vmem:[#allocation2 + $0x108] sm:$0xff] %vm1077, %v1069
      %1112 = vst.msk [vmem:[#allocation2 + $0x110] sm:$0xff] %vm1077, %v1070
      %1113 = vst.msk [vmem:[#allocation2 + $0x118] sm:$0xff] %vm1077, %v1071
      %1114 = vst.msk [vmem:[#allocation2 + $0x120] sm:$0xff] %vm1077, %v1072
      %1115 = vst.msk [vmem:[#allocation2 + $0x128] sm:$0xff] %vm1077, %v1073
      %1116 = vst.msk [vmem:[#allocation2 + $0x130] sm:$0xff] %vm1077, %v1074
      %1117 = vst.msk [vmem:[#allocation2 + $0x138] sm:$0xff] %vm1077, %v1075
      %vm1118 = vcmask 27648
      %1119 = vst.msk [vmem:[#allocation2 + $0x140] sm:$0xf] %vm1118, %v1076
      %v1120 = vld [vmem:[#allocation2] sm:$0xff]
      %v1121 = vld [vmem:[#allocation2 + $0x8] sm:$0xff]
      %v1122 = vld [vmem:[#allocation2 + $0x10] sm:$0xff]
      %v1123 = vld [vmem:[#allocation2 + $0x18] sm:$0xff]
      %v1124 = vld [vmem:[#allocation2 + $0x20] sm:$0xff]
      %v1125 = vld [vmem:[#allocation2 + $0x28] sm:$0xff]
      %v1126 = vld [vmem:[#allocation2 + $0x30] sm:$0xff]
      %v1127 = vld [vmem:[#allocation2 + $0x38] sm:$0xff]
      %v1128 = vld [vmem:[#allocation2 + $0x40] sm:$0x7f]
      %v1129 = vld [vmem:[%s4] sm:$0x1]
      %v1130 = vlaneseq
      %v1131 = vshrl.u32 %v1130, 7
      %v1132 = vsub.s32 0, %v1131
      %v1133 = vrot.slane %v1129, %v1132
      %v1134 = vmul.f32 %v1120, %v1133
      %v1135 = vmul.f32 %v1121, %v1133
      %v1136 = vmul.f32 %v1122, %v1133
      %v1137 = vmul.f32 %v1123, %v1133
      %v1138 = vmul.f32 %v1124, %v1133
      %v1139 = vmul.f32 %v1125, %v1133
      %v1140 = vmul.f32 %v1126, %v1133
      %v1141 = vmul.f32 %v1127, %v1133
      %v1142 = vmul.f32 %v1128, %v1133
      %v1143 = vld [vmem:[#allocation2 + $0x51] sm:$0xff]
      %v1144 = vld [vmem:[#allocation2 + $0x59] sm:$0xff]
      %v1145 = vld [vmem:[#allocation2 + $0x61] sm:$0xff]
      %v1146 = vld [vmem:[#allocation2 + $0x69] sm:$0xff]
      %v1147 = vld [vmem:[#allocation2 + $0x71] sm:$0xff]
      %v1148 = vld [vmem:[#allocation2 + $0x79] sm:$0xff]
      %v1149 = vld [vmem:[#allocation2 + $0x81] sm:$0xff]
      %v1150 = vld [vmem:[#allocation2 + $0x89] sm:$0xff]
      %v1151 = vld [vmem:[#allocation2 + $0x91] sm:$0x7f]
      %v1152 = vld [vmem:[%s4 + $0x1] sm:$0x1]
      %v1153 = vlaneseq
      %v1154 = vshrl.u32 %v1153, 7
      %v1155 = vsub.s32 0, %v1154
      %v1156 = vrot.slane %v1152, %v1155
      %v1157 = vmul.f32 %v1143, %v1156
      %v1158 = vmul.f32 %v1144, %v1156
      %v1159 = vmul.f32 %v1145, %v1156
      %v1160 = vmul.f32 %v1146, %v1156
      %v1161 = vmul.f32 %v1147, %v1156
      %v1162 = vmul.f32 %v1148, %v1156
      %v1163 = vmul.f32 %v1149, %v1156
      %v1164 = vmul.f32 %v1150, %v1156
      %v1165 = vmul.f32 %v1151, %v1156
      %v1166 = vadd.f32 %v1134, %v1157
      %v1167 = vadd.f32 %v1135, %v1158
      %v1168 = vadd.f32 %v1136, %v1159
      %v1169 = vadd.f32 %v1137, %v1160
      %v1170 = vadd.f32 %v1138, %v1161
      %v1171 = vadd.f32 %v1139, %v1162
      %v1172 = vadd.f32 %v1140, %v1163
      %v1173 = vadd.f32 %v1141, %v1164
      %v1174 = vadd.f32 %v1142, %v1165
      %v1175 = vld [vmem:[#allocation2 + $0x1] sm:$0xff]
      %v1176 = vld [vmem:[#allocation2 + $0x9] sm:$0xff]
      %v1177 = vld [vmem:[#allocation2 + $0x11] sm:$0xff]
      %v1178 = vld [vmem:[#allocation2 + $0x19] sm:$0xff]
      %v1179 = vld [vmem:[#allocation2 + $0x21] sm:$0xff]
      %v1180 = vld [vmem:[#allocation2 + $0x29] sm:$0xff]
      %v1181 = vld [vmem:[#allocation2 + $0x31] sm:$0xff]
      %v1182 = vld [vmem:[#allocation2 + $0x39] sm:$0xff]
      %v1183 = vld [vmem:[#allocation2 + $0x41] sm:$0x7f]
      %v1184 = vld [vmem:[%s4 + $0x2] sm:$0x1]
      %v1185 = vlaneseq
      %v1186 = vshrl.u32 %v1185, 7
      %v1187 = vsub.s32 0, %v1186
      %v1188 = vrot.slane %v1184, %v1187
      %v1189 = vmul.f32 %v1175, %v1188
      %v1190 = vmul.f32 %v1176, %v1188
      %v1191 = vmul.f32 %v1177, %v1188
      %v1192 = vmul.f32 %v1178, %v1188
      %v1193 = vmul.f32 %v1179, %v1188
      %v1194 = vmul.f32 %v1180, %v1188
      %v1195 = vmul.f32 %v1181, %v1188
      %v1196 = vmul.f32 %v1182, %v1188
      %v1197 = vmul.f32 %v1183, %v1188
      %v1198 = vadd.f32 %v1166, %v1189
      %v1199 = vadd.f32 %v1167, %v1190
      %v1200 = vadd.f32 %v1168, %v1191
      %v1201 = vadd.f32 %v1169, %v1192
      %v1202 = vadd.f32 %v1170, %v1193
      %v1203 = vadd.f32 %v1171, %v1194
      %v1204 = vadd.f32 %v1172, %v1195
      %v1205 = vadd.f32 %v1173, %v1196
      %v1206 = vadd.f32 %v1174, %v1197
      %v1207 = vld [vmem:[#allocation2 + $0xa2] sm:$0xff]
      %v1208 = vld [vmem:[#allocation2 + $0xaa] sm:$0xff]
      %v1209 = vld [vmem:[#allocation2 + $0xb2] sm:$0xff]
      %v1210 = vld [vmem:[#allocation2 + $0xba] sm:$0xff]
      %v1211 = vld [vmem:[#allocation2 + $0xc2] sm:$0xff]
      %v1212 = vld [vmem:[#allocation2 + $0xca] sm:$0xff]
      %v1213 = vld [vmem:[#allocation2 + $0xd2] sm:$0xff]
      %v1214 = vld [vmem:[#allocation2 + $0xda] sm:$0xff]
      %v1215 = vld [vmem:[#allocation2 + $0xe2] sm:$0x7f]
      %v1216 = vld [vmem:[%s4 + $0x3] sm:$0x1]
      %v1217 = vlaneseq
      %v1218 = vshrl.u32 %v1217, 7
      %v1219 = vsub.s32 0, %v1218
      %v1220 = vrot.slane %v1216, %v1219
      %v1221 = vmul.f32 %v1207, %v1220
      %v1222 = vmul.f32 %v1208, %v1220
      %v1223 = vmul.f32 %v1209, %v1220
      %v1224 = vmul.f32 %v1210, %v1220
      %v1225 = vmul.f32 %v1211, %v1220
      %v1226 = vmul.f32 %v1212, %v1220
      %v1227 = vmul.f32 %v1213, %v1220
      %v1228 = vmul.f32 %v1214, %v1220
      %v1229 = vmul.f32 %v1215, %v1220
      %v1230 = vadd.f32 %v1198, %v1221
      %v1231 = vadd.f32 %v1199, %v1222
      %v1232 = vadd.f32 %v1200, %v1223
      %v1233 = vadd.f32 %v1201, %v1224
      %v1234 = vadd.f32 %v1202, %v1225
      %v1235 = vadd.f32 %v1203, %v1226
      %v1236 = vadd.f32 %v1204, %v1227
      %v1237 = vadd.f32 %v1205, %v1228
      %v1238 = vadd.f32 %v1206, %v1229
      %v1239 = vld [vmem:[#allocation2 + $0xf3] sm:$0xff]
      %v1240 = vld [vmem:[#allocation2 + $0xfb] sm:$0xff]
      %v1241 = vld [vmem:[#allocation2 + $0x103] sm:$0xff]
      %v1242 = vld [vmem:[#allocation2 + $0x10b] sm:$0xff]
      %v1243 = vld [vmem:[#allocation2 + $0x113] sm:$0xff]
      %v1244 = vld [vmem:[#allocation2 + $0x11b] sm:$0xff]
      %v1245 = vld [vmem:[#allocation2 + $0x123] sm:$0xff]
      %v1246 = vld [vmem:[#allocation2 + $0x12b] sm:$0xff]
      %v1247 = vld [vmem:[#allocation2 + $0x133] sm:$0x7f]
      %v1248 = vld [vmem:[%s4 + $0x4] sm:$0x1]
      %v1249 = vlaneseq
      %v1250 = vshrl.u32 %v1249, 7
      %v1251 = vsub.s32 0, %v1250
      %v1252 = vrot.slane %v1248, %v1251
      %v1253 = vmul.f32 %v1239, %v1252
      %v1254 = vmul.f32 %v1240, %v1252
      %v1255 = vmul.f32 %v1241, %v1252
      %v1256 = vmul.f32 %v1242, %v1252
      %v1257 = vmul.f32 %v1243, %v1252
      %v1258 = vmul.f32 %v1244, %v1252
      %v1259 = vmul.f32 %v1245, %v1252
      %v1260 = vmul.f32 %v1246, %v1252
      %v1261 = vmul.f32 %v1247, %v1252
      %v1262 = vadd.f32 %v1230, %v1253
      %v1263 = vadd.f32 %v1231, %v1254
      %v1264 = vadd.f32 %v1232, %v1255
      %v1265 = vadd.f32 %v1233, %v1256
      %v1266 = vadd.f32 %v1234, %v1257
      %v1267 = vadd.f32 %v1235, %v1258
      %v1268 = vadd.f32 %v1236, %v1259
      %v1269 = vadd.f32 %v1237, %v1260
      %v1270 = vadd.f32 %v1238, %v1261
      %v1271 = vld [vmem:[#allocation2 + $0xa3] sm:$0xff]
      %v1272 = vld [vmem:[#allocation2 + $0xab] sm:$0xff]
      %v1273 = vld [vmem:[#allocation2 + $0xb3] sm:$0xff]
      %v1274 = vld [vmem:[#allocation2 + $0xbb] sm:$0xff]
      %v1275 = vld [vmem:[#allocation2 + $0xc3] sm:$0xff]
      %v1276 = vld [vmem:[#allocation2 + $0xcb] sm:$0xff]
      %v1277 = vld [vmem:[#allocation2 + $0xd3] sm:$0xff]
      %v1278 = vld [vmem:[#allocation2 + $0xdb] sm:$0xff]
      %v1279 = vld [vmem:[#allocation2 + $0xe3] sm:$0x7f]
      %v1280 = vld [vmem:[%s4 + $0x5] sm:$0x1]
      %v1281 = vlaneseq
      %v1282 = vshrl.u32 %v1281, 7
      %v1283 = vsub.s32 0, %v1282
      %v1284 = vrot.slane %v1280, %v1283
      %v1285 = vmul.f32 %v1271, %v1284
      %v1286 = vmul.f32 %v1272, %v1284
      %v1287 = vmul.f32 %v1273, %v1284
      %v1288 = vmul.f32 %v1274, %v1284
      %v1289 = vmul.f32 %v1275, %v1284
      %v1290 = vmul.f32 %v1276, %v1284
      %v1291 = vmul.f32 %v1277, %v1284
      %v1292 = vmul.f32 %v1278, %v1284
      %v1293 = vmul.f32 %v1279, %v1284
      %v1294 = vadd.f32 %v1262, %v1285
      %v1295 = vadd.f32 %v1263, %v1286
      %v1296 = vadd.f32 %v1264, %v1287
      %v1297 = vadd.f32 %v1265, %v1288
      %v1298 = vadd.f32 %v1266, %v1289
      %v1299 = vadd.f32 %v1267, %v1290
      %v1300 = vadd.f32 %v1268, %v1291
      %v1301 = vadd.f32 %v1269, %v1292
      %v1302 = vadd.f32 %v1270, %v1293
      %v1303 = vld [vmem:[#allocation2 + $0x41] sm:$0xff]
      %v1304 = vld [vmem:[#allocation2 + $0x49] sm:$0x7f]
      %v1305 = vld [vmem:[%s4 + $0x6] sm:$0x1]
      %v1306 = vlaneseq
      %v1307 = vshrl.u32 %v1306, 7
      %v1308 = vsub.s32 0, %v1307
      %v1309 = vrot.slane %v1305, %v1308
      %v1310 = vmul.f32 %v1176, %v1309
      %v1311 = vmul.f32 %v1177, %v1309
      %v1312 = vmul.f32 %v1178, %v1309
      %v1313 = vmul.f32 %v1179, %v1309
      %v1314 = vmul.f32 %v1180, %v1309
      %v1315 = vmul.f32 %v1181, %v1309
      %v1316 = vmul.f32 %v1182, %v1309
      %v1317 = vmul.f32 %v1303, %v1309
      %v1318 = vmul.f32 %v1304, %v1309
      %v1319 = vadd.f32 %v1294, %v1310
      %v1320 = vadd.f32 %v1295, %v1311
      %v1321 = vadd.f32 %v1296, %v1312
      %v1322 = vadd.f32 %v1297, %v1313
      %v1323 = vadd.f32 %v1298, %v1314
      %v1324 = vadd.f32 %v1299, %v1315
      %v1325 = vadd.f32 %v1300, %v1316
      %v1326 = vadd.f32 %v1301, %v1317
      %v1327 = vadd.f32 %v1302, %v1318
      %v1328 = vld [vmem:[#allocation2 + $0x5a] sm:$0xff]
      %v1329 = vld [vmem:[#allocation2 + $0x62] sm:$0xff]
      %v1330 = vld [vmem:[#allocation2 + $0x6a] sm:$0xff]
      %v1331 = vld [vmem:[#allocation2 + $0x72] sm:$0xff]
      %v1332 = vld [vmem:[#allocation2 + $0x7a] sm:$0xff]
      %v1333 = vld [vmem:[#allocation2 + $0x82] sm:$0xff]
      %v1334 = vld [vmem:[#allocation2 + $0x8a] sm:$0xff]
      %v1335 = vld [vmem:[#allocation2 + $0x92] sm:$0xff]
      %v1336 = vld [vmem:[#allocation2 + $0x9a] sm:$0x7f]
      %v1337 = vld [vmem:[%s4 + $0x7] sm:$0x1]
      %v1338 = vlaneseq
      %v1339 = vshrl.u32 %v1338, 7
      %v1340 = vsub.s32 0, %v1339
      %v1341 = vrot.slane %v1337, %v1340
      %v1342 = vmul.f32 %v1328, %v1341
      %v1343 = vmul.f32 %v1329, %v1341
      %v1344 = vmul.f32 %v1330, %v1341
      %v1345 = vmul.f32 %v1331, %v1341
      %v1346 = vmul.f32 %v1332, %v1341
      %v1347 = vmul.f32 %v1333, %v1341
      %v1348 = vmul.f32 %v1334, %v1341
      %v1349 = vmul.f32 %v1335, %v1341
      %v1350 = vmul.f32 %v1336, %v1341
      %v1351 = vadd.f32 %v1319, %v1342
      %v1352 = vadd.f32 %v1320, %v1343
      %v1353 = vadd.f32 %v1321, %v1344
      %v1354 = vadd.f32 %v1322, %v1345
      %v1355 = vadd.f32 %v1323, %v1346
      %v1356 = vadd.f32 %v1324, %v1347
      %v1357 = vadd.f32 %v1325, %v1348
      %v1358 = vadd.f32 %v1326, %v1349
      %v1359 = vadd.f32 %v1327, %v1350
      %v1360 = vld [vmem:[#allocation2 + $0xa] sm:$0xff]
      %v1361 = vld [vmem:[#allocation2 + $0x12] sm:$0xff]
      %v1362 = vld [vmem:[#allocation2 + $0x1a] sm:$0xff]
      %v1363 = vld [vmem:[#allocation2 + $0x22] sm:$0xff]
      %v1364 = vld [vmem:[#allocation2 + $0x2a] sm:$0xff]
      %v1365 = vld [vmem:[#allocation2 + $0x32] sm:$0xff]
      %v1366 = vld [vmem:[#allocation2 + $0x3a] sm:$0xff]
      %v1367 = vld [vmem:[#allocation2 + $0x42] sm:$0xff]
      %v1368 = vld [vmem:[#allocation2 + $0x4a] sm:$0x7f]
      %v1369 = vld [vmem:[%s4 + $0x8] sm:$0x1]
      %v1370 = vlaneseq
      %v1371 = vshrl.u32 %v1370, 7
      %v1372 = vsub.s32 0, %v1371
      %v1373 = vrot.slane %v1369, %v1372
      %v1374 = vmul.f32 %v1360, %v1373
      %v1375 = vmul.f32 %v1361, %v1373
      %v1376 = vmul.f32 %v1362, %v1373
      %v1377 = vmul.f32 %v1363, %v1373
      %v1378 = vmul.f32 %v1364, %v1373
      %v1379 = vmul.f32 %v1365, %v1373
      %v1380 = vmul.f32 %v1366, %v1373
      %v1381 = vmul.f32 %v1367, %v1373
      %v1382 = vmul.f32 %v1368, %v1373
      %v1383 = vadd.f32 %v1351, %v1374
      %v1384 = vadd.f32 %v1352, %v1375
      %v1385 = vadd.f32 %v1353, %v1376
      %v1386 = vadd.f32 %v1354, %v1377
      %v1387 = vadd.f32 %v1355, %v1378
      %v1388 = vadd.f32 %v1356, %v1379
      %v1389 = vadd.f32 %v1357, %v1380
      %v1390 = vadd.f32 %v1358, %v1381
      %v1391 = vadd.f32 %v1359, %v1382
      %v1392 = vld [vmem:[%s5] sm:$0x1]
      %v1394 = vlaneseq
      %v1395 = vshrl.u32 %v1394, 7
      %v1396 = vsub.s32 0, %v1395
      %v1397 = vrot.slane %v1392, %v1396
      %v1399 = vadd.f32 %v1383, %v1397
      %v1400 = vadd.f32 %v1384, %v1397
      %v1401 = vadd.f32 %v1385, %v1397
      %v1402 = vadd.f32 %v1386, %v1397
      %v1403 = vadd.f32 %v1387, %v1397
      %v1404 = vadd.f32 %v1388, %v1397
      %v1405 = vadd.f32 %v1389, %v1397
      %v1406 = vadd.f32 %v1390, %v1397
      %v1407 = vadd.f32 %v1391, %v1397
      %v1408 = vmax.f32 %v1399, 0.0
      %v1409 = vmax.f32 %v1400, 0.0
      %v1410 = vmax.f32 %v1401, 0.0
      %v1411 = vmax.f32 %v1402, 0.0
      %v1412 = vmax.f32 %v1403, 0.0
      %v1413 = vmax.f32 %v1404, 0.0
      %v1414 = vmax.f32 %v1405, 0.0
      %v1415 = vmax.f32 %v1406, 0.0
      %v1416 = vmax.f32 %v1407, 0.0
      %v1417 = vld [vmem:[%s6] sm:$0xf]
      %v1418 = vld [vmem:[%s7] sm:$0x1]
      %v1420 = vlaneseq
      %v1421 = vshrl.u32 %v1420, 7
      %v1422 = vsub.s32 0, %v1421
      %v1423 = vrot.slane %v1418, %v1422
      %v1426 = vsel %vm1077, %v1408, 0
      %v1429 = vsel %vm1077, %v1409, 0
      %v1432 = vsel %vm1077, %v1410, 0
      %v1435 = vsel %vm1077, %v1411, 0
      %v1438 = vsel %vm1077, %v1412, 0
      %v1441 = vsel %vm1077, %v1413, 0
      %v1444 = vsel %vm1077, %v1414, 0
      %v1447 = vsel %vm1077, %v1415, 0
      %v1450 = vsel %vm1077, %v1416, 0
      %vm1452 = vcmask 1043456
      %v1454 = vsel %vm1452, %v1417, 0
      %1456 = vmatprep.subr.mxu0 0.0
      %1457 = vmatpush1.msra.mxu0 %v1454
      %1458 = vmatprep.subr.mxu0 0.0
      %1459 = vmatpush1.msra.mxu0 0.0
      %1460 = vmatprep.subr.mxu0 0.0
      %1461 = vmatpush1.msra.mxu0 0.0
      %1462 = vmatprep.subr.mxu0 0.0
      %1463 = vmatpush1.msra.mxu0 0.0
      %1464 = vmatprep.subr.mxu0 0.0
      %1465 = vmatpush1.msra.mxu0 0.0
      %1466 = vmatprep.subr.mxu0 0.0
      %1467 = vmatpush1.msra.mxu0 0.0
      %1468 = vmatprep.subr.mxu0 0.0
      %1469 = vmatpush1.msra.mxu0 0.0
      %1470 = vmatprep.subr.mxu0 0.0
      %1471 = vmatpush1.msra.mxu0 0.0
      %1472 = vmatprep.subr.mxu0 0.0
      %1473 = vmatpush1.msra.mxu0 0.0
      %1474 = vmatprep.subr.mxu0 0.0
      %1475 = vmatpush1.msra.mxu0 0.0
      %1476 = vmatprep.subr.mxu0 0.0
      %1477 = vmatpush1.msra.mxu0 0.0
      %1478 = vmatprep.subr.mxu0 0.0
      %1479 = vmatpush1.msra.mxu0 0.0
      %1480 = vmatprep.subr.mxu0 0.0
      %1481 = vmatpush1.msra.mxu0 0.0
      %1482 = vmatprep.subr.mxu0 0.0
      %1483 = vmatpush1.msra.mxu0 0.0
      %1484 = vmatprep.subr.mxu0 0.0
      %1485 = vmatpush1.msra.mxu0 0.0
      %1486 = vmatprep.subr.mxu0 0.0
      %1487 = vmatpush1.msra.mxu0 0.0
      %1488 = vmatprep.subr.mxu0 0.0
      %1489 = vmatpush1.msra.mxu0 0.0
      %1490 = vmatprep.subr.mxu0 0.0
      %1491 = vmatpush1.msra.mxu0 0.0
      %1492 = vmatprep.subr.mxu0 0.0
      %1493 = vmatpush1.msra.mxu0 0.0
      %1494 = vmatprep.subr.mxu0 0.0
      %1495 = vmatpush1.msra.mxu0 0.0
      %1496 = vmatprep.subr.mxu0 0.0
      %1497 = vmatpush1.msra.mxu0 0.0
      %1498 = vmatprep.subr.mxu0 0.0
      %1499 = vmatpush1.msra.mxu0 0.0
      %1500 = vmatprep.subr.mxu0 0.0
      %1501 = vmatpush1.msra.mxu0 0.0
      %1502 = vmatprep.subr.mxu0 0.0
      %1503 = vmatpush1.msra.mxu0 0.0
      %1504 = vmatprep.subr.mxu0 0.0
      %1505 = vmatpush1.msra.mxu0 0.0
      %1506 = vmatprep.subr.mxu0 0.0
      %1507 = vmatpush1.msra.mxu0 0.0
      %1508 = vmatprep.subr.mxu0 0.0
      %1509 = vmatpush1.msra.mxu0 0.0
      %1510 = vmatprep.subr.mxu0 0.0
      %1511 = vmatpush1.msra.mxu0 0.0
      %1512 = vmatprep.subr.mxu0 0.0
      %1513 = vmatpush1.msra.mxu0 0.0
      %1514 = vmatprep.subr.mxu0 0.0
      %1515 = vmatpush1.msra.mxu0 0.0
      %1516 = vmatprep.subr.mxu0 0.0
      %1517 = vmatpush1.msra.mxu0 0.0
      %1518 = vmatprep.subr.mxu0 0.0
      %1519 = vmatpush1.msra.mxu0 0.0
      %1520 = vmatprep.mubr.f32.mxu0 0.0
      %1521 = vmatmul.mubr.f32.gmra.mrb[0].mxu0 %v1426
      %v1522 = vpop.f32.mrb[0].mxu0
      %v1523 = vadd.f32 %v1423, %v1522
      %v1524 = vpop.f32.mrb[0].mxu0
      %1525 = vmatprep.mubr.f32.mxu0 0.0
      %1526 = vmatmul.mubr.f32.gmra.mrb[0].mxu0 %v1429
      %v1527 = vpop.f32.mrb[0].mxu0
      %v1528 = vadd.f32 %v1423, %v1527
      %v1529 = vpop.f32.mrb[0].mxu0
      %1530 = vmatprep.mubr.f32.mxu0 0.0
      %1531 = vmatmul.mubr.f32.gmra.mrb[0].mxu0 %v1432
      %v1532 = vpop.f32.mrb[0].mxu0
      %v1533 = vadd.f32 %v1423, %v1532
      %v1534 = vpop.f32.mrb[0].mxu0
      %1535 = vmatprep.mubr.f32.mxu0 0.0
      %1536 = vmatmul.mubr.f32.gmra.mrb[0].mxu0 %v1435
      %v1537 = vpop.f32.mrb[0].mxu0
      %v1538 = vadd.f32 %v1423, %v1537
      %v1539 = vpop.f32.mrb[0].mxu0
      %1540 = vmatprep.mubr.f32.mxu0 0.0
      %1541 = vmatmul.mubr.f32.gmra.mrb[0].mxu0 %v1438
      %v1542 = vpop.f32.mrb[0].mxu0
      %v1543 = vadd.f32 %v1423, %v1542
      %v1544 = vpop.f32.mrb[0].mxu0
      %1545 = vmatprep.mubr.f32.mxu0 0.0
      %1546 = vmatmul.mubr.f32.gmra.mrb[0].mxu0 %v1441
      %v1547 = vpop.f32.mrb[0].mxu0
      %v1548 = vadd.f32 %v1423, %v1547
      %v1549 = vpop.f32.mrb[0].mxu0
      %1550 = vmatprep.mubr.f32.mxu0 0.0
      %1551 = vmatmul.mubr.f32.gmra.mrb[0].mxu0 %v1444
      %v1552 = vpop.f32.mrb[0].mxu0
      %v1553 = vadd.f32 %v1423, %v1552
      %v1554 = vpop.f32.mrb[0].mxu0
      %1555 = vmatprep.mubr.f32.mxu0 0.0
      %1556 = vmatmul.mubr.f32.gmra.mrb[0].mxu0 %v1447
      %v1557 = vpop.f32.mrb[0].mxu0
      %v1558 = vadd.f32 %v1423, %v1557
      %v1559 = vpop.f32.mrb[0].mxu0
      %1560 = vmatprep.mubr.f32.mxu0 0.0
      %1561 = vmatmul.mubr.f32.gmra.mrb[0].mxu0 %v1450
      %v1562 = vpop.f32.mrb[0].mxu0
      %v1563 = vadd.f32 %v1423, %v1562
      %v1564 = vpop.f32.mrb[0].mxu0
      %1565 = vdwg.mxu0
      %v1566 = vmax.f32 %v1523, 0.0
      %v1567 = vmax.f32 %v1528, 0.0
      %v1568 = vmax.f32 %v1533, 0.0
      %v1569 = vmax.f32 %v1538, 0.0
      %v1570 = vmax.f32 %v1543, 0.0
      %v1571 = vmax.f32 %v1548, 0.0
      %v1572 = vmax.f32 %v1553, 0.0
      %v1573 = vmax.f32 %v1558, 0.0
      %v1574 = vmax.f32 %v1563, 0.0
      %1575 = vst [vmem:[%s305] sm:$0xff] %v1566
      %1576 = vst [vmem:[%s305 + $0x8] sm:$0xff] %v1567
      %1577 = vst [vmem:[%s305 + $0x10] sm:$0xff] %v1568
      %1578 = vst [vmem:[%s305 + $0x18] sm:$0xff] %v1569
      %1579 = vst [vmem:[%s305 + $0x20] sm:$0xff] %v1570
      %1580 = vst [vmem:[%s305 + $0x28] sm:$0xff] %v1571
      %1581 = vst [vmem:[%s305 + $0x30] sm:$0xff] %v1572
      %1582 = vst [vmem:[%s305 + $0x38] sm:$0xff] %v1573
      %1583 = vst [vmem:[%s305 + $0x40] sm:$0x7f] %v1574
      %p1584 = scmp.lt.s32.totalorder %s19, 1
      %s1585 = scalar_select %p1584, %s19, 1
      %s1586 = smul.addr %s1585, 9
      %s1587 = smul.addr %s1586, 8
      %s1588 = scalar_lea.vmem %s8, %s1587
      // Predicated region
      $region53: #{tpu_custom_call.1} parent=51 // pred_check
        %p1589 = pneg %p210
      $region54: #{tpu_custom_call.1} parent=51 // pred_check_branch
        %1591 = sbr.rel (%p1589) target = $region56
      $region55: #{tpu_custom_call.1} parent=51 // pred_region
        _
      $region56: #{tpu_custom_call.1} parent=51 // pred_fallthru
        _
    $region52: #{tpu_custom_call.1} parent=5 // pred_fallthru
      _
    %p1592 = scmp.le.s32.totalorder 2, %s14
    // Predicated region
    $region57: #{tpu_custom_call.1} parent=5 // pred_check
      %p1593 = pneg %p1592
    $region58: #{tpu_custom_call.1} parent=5 // pred_check_branch
      %1595 = sbr.rel (%p1593) target = $region60
    $region59: #{tpu_custom_call.1} parent=5 // pred_region
      %s1596 = ssub.s32 %s14, 2
      // Predicated region
      $region61: #{tpu_custom_call.1} parent=59 // pred_check
        %p1597 = pneg %p216
      $region62: #{tpu_custom_call.1} parent=59 // pred_check_branch
        %1599 = sbr.rel (%p1597) target = $region64
      $region63: #{tpu_custom_call.1} parent=59 // pred_region
        %p1600 = scmp.lt.s32.totalorder %s20, 1
        %s1601 = scalar_select %p1600, %s20, 1
        %s1602 = smul.addr %s1601, 9
        %s1603 = smul.addr %s1602, 8
        %s1604 = scalar_lea.vmem %s8, %s1603
      $region64: #{tpu_custom_call.1} parent=59 // pred_fallthru
        _
    $region60: #{tpu_custom_call.1} parent=5 // pred_fallthru
      _
  $region6: #{tpu_custom_call.1} parent=0 // loop_footer
    %s18 = sadd.s32 1, %s14
  $region7: #{tpu_custom_call.1} parent=0 // loop_footer_branch
    %13 = sbr.rel target = $region3
  $region8: #{tpu_custom_call.1} parent=0 // loop_exit
    _

</llo_original>
